<compile_context>
chip_gen: v7x
topology: tpu7x:2x2x1
jax: 0.10.0
libtpu: 0.0.40
codegen_flags: <defaults>
</compile_context>

<pallas_src>
import functools
import math

import jax
import jax.numpy as jnp
from jax.experimental import pallas as pl
from jax.experimental.pallas import tpu as pltpu


KP = 128  # classifier output padded to a full 128-lane register (lane-dense output stores)


# ----------------------------------------------------------------------------
# Pack a 3x3 HWIO conv kernel into a GEMM weight matrix.
#
# GEMM LHS rows are (b, out_row h); LHS lanes are (dy, padded column wp, cin).
# GEMM column `col` produces output pixel-column out_w[col], channel out_o[col]:
#     W[(dy, wp, c), col] = k[dy, wp - out_w[col], c, out_o[col]]  if 0 <= wp - out_w[col] <= 2
#                           0                                       otherwise
# (Padding columns get weights too, but their LHS entries are zero, so they contribute 0.)
# ----------------------------------------------------------------------------
def _conv3x3_as_gemm_weight(k_hwio, w_pad, out_w, out_o):
    kh, kw, cin, cout = k_hwio.shape
    assert kh == 3 and kw == 3
    rows = 3 * w_pad * cin
    r = jnp.arange(rows, dtype=jnp.int32)
    dy = r // (w_pad * cin)
    wp = (r % (w_pad * cin)) // cin
    c = r % cin
    out_w = out_w.astype(jnp.int32)
    out_o = out_o.astype(jnp.int32)
    dx = wp[:, None] - out_w[None, :]
    valid = (dx >= 0) & (dx <= 2)
    dxc = jnp.clip(dx, 0, 2)
    flat = k_hwio.reshape(-1)
    idx = ((dy[:, None] * 3 + dxc) * cin + c[:, None]) * cout + out_o[None, :]
    return jnp.where(valid, flat[idx], 0.0)


# ----------------------------------------------------------------------------
# Fused forward kernel: one grid step per batch tile of `bt` images.
# ----------------------------------------------------------------------------
def _fused_kernel(x_ref,                      # (bt, H, W*C0)          f32
                  w1_ref, b1_ref,             # (3*P1*C0, W*C1) bf16 ; (1, W*C1)  f32
                  w2_ref, b2_ref,             # (3*P2*C1, W2*C2) bf16; (1, W2*C2) f32
                  wc1_ref, bc1_ref,           # (C2, F)  bf16 ; (1, F)  f32
                  wc2_ref, bc2_ref,           # (F, F)   bf16 ; (1, F)  f32
                  wc3_ref, bc3_ref,           # (F, KP)  bf16 ; (1, KP) f32  (pad bias = -1e30)
                  sm_ref, lsm_ref,            # (W2, bt, H2, KP) f32 outputs
                  lhs1_ref,                   # (bt*H, 3*P1*C0)  bf16  conv1 dy-im2col
                  a1_ref,                     # (bt*H, W*C1)     f32   conv1 output (pool source)
                  lhs2_ref,                   # (bt*H2, 3*P2*C1) bf16  conv2 dy-im2col
                  a2pix_ref,                  # (bt*H2*W2, C2)   bf16  per-pixel rows (classifier)
                  *, bt, H, W, C0, C1, C2, H2, W2, P1, P2):
    f32 = jnp.float32
    bf16 = jnp.bfloat16
    WC0 = W * C0
    W2C1 = W2 * C1
    P1C0 = P1 * C0
    P2C1 = P2 * C1
    BH2 = bt * H2

    # ---------------- conv1: 3x3 SAME (C0 -> C1), one MXU GEMM ----------------
    # Horizontal taps + SAME padding live in w1_ref; only vertical (dy) shifts are staged here.
    lhs1_ref[...] = jnp.zeros(lhs1_ref.shape, lhs1_ref.dtype)
    for b in range(bt):
        for dy in range(3):
            src_lo = max(0, dy - 1)
            dst_lo = max(0, 1 - dy)
            n = H - abs(dy - 1)
            lhs1_ref[pl.ds(b * H + dst_lo, n),
                     pl.ds(dy * P1C0 + C0, WC0)] = (
                         x_ref[b, pl.ds(src_lo, n), :].astype(bf16))

    a1 = jnp.dot(lhs1_ref[...], w1_ref[...], preferred_element_type=f32)
    a1_ref[...] = jnp.maximum(a1 + b1_ref[...], 0.0)      # lanes ordered (w-parity, w2, c1)

    # ---------------- 2x2 max-pool, stride 2 ----------------
    # Rows: stride-2 sublane reads.  Columns: conv1's lane ordering puts even / odd output
    # columns in the two contiguous lane halves, so the W pool is a max of static halves.
    r_even = a1_ref[pl.ds(0, BH2, stride=2), :]
    r_odd = a1_ref[pl.ds(1, BH2, stride=2), :]
    rowmax = jnp.maximum(r_even, r_odd)
    pooled = jnp.maximum(rowmax[:, :W2C1], rowmax[:, W2C1:])    # (bt*H2, W2*C1)

    # ---------------- conv2: 3x3 SAME (C1 -> C2), one MXU GEMM ----------------
    lhs2_ref[...] = jnp.zeros(lhs2_ref.shape, lhs2_ref.dtype)
    for b in range(bt):
        for dy in range(3):
            src_lo = max(0, dy - 1)
            dst_lo = max(0, 1 - dy)
            n = H2 - abs(dy - 1)
            lhs2_ref[pl.ds(b * H2 + dst_lo, n),
                     pl.ds(dy * P2C1 + C1, W2C1)] = (
                         pooled[b * H2 + src_lo:b * H2 + src_lo + n, :].astype(bf16))

    a2 = jnp.dot(lhs2_ref[...], w2_ref[...], preferred_element_type=f32)
    a2 = jnp.maximum(a2 + b2_ref[...], 0.0)                # (bt*H2, W2*C2), lanes (w2, c2)

    # ---------------- fat-lane map -> per-pixel rows, ordered (w2, b, h2) ----------------
    # The 1x1-conv classifier is permutation-invariant over pixels, so pick the pixel-row order
    # that needs only contiguous stores; the wrapper undoes it with a cheap host-side transpose.
    for w2 in range(W2):
        a2pix_ref[pl.ds(w2 * BH2, BH2), :] = a2[:, w2 * C2:(w2 + 1) * C2].astype(bf16)

    # ---------------- classifier 'rd1': 1x1 convs == per-pixel GEMM chain ----------------
    # (Dropout layers are identity in eval mode.)
    hid = jnp.dot(a2pix_ref[...], wc1_ref[...], preferred_element_type=f32)
    hid = jnp.maximum(hid + bc1_ref[...], 0.0)
    hid = jnp.dot(hid.astype(bf16), wc2_ref[...], preferred_element_type=f32)
    hid = jnp.maximum(hid + bc2_ref[...], 0.0)
    logits = jnp.dot(hid.astype(bf16), wc3_ref[...], preferred_element_type=f32) + bc3_ref[...]
    # padded class lanes carry a -1e30 bias -> exp() == 0 there, softmax sees real classes only.

    # ---------------- softmax / log-softmax over classes (lane axis) ----------------
    m = jnp.max(logits, axis=-1, keepdims=True)
    z = logits - m
    s = jnp.sum(jnp.exp(z), axis=-1, keepdims=True)
    lsm = z - jnp.log(s)
    sm = jnp.exp(lsm)                                      # exactly exp(log_softmax)

    sm_ref[...] = sm.reshape(W2, bt, H2, KP)               # free reshape (minor dims unchanged)
    lsm_ref[...] = lsm.reshape(W2, bt, H2, KP)


# ----------------------------------------------------------------------------
# Wrapper: one pallas_call for the whole forward pass, grid over batch tiles.
# ----------------------------------------------------------------------------
def _region_detector_pallas(x_nhwc, params):
    N, H, W, C0 = x_nhwc.shape
    assert H % 2 == 0 and W % 2 == 0
    C1 = params["w_b1"].shape[-1]
    C2 = params["w_b2"].shape[-1]
    F = params["w_c1"].shape[-1]
    K = params["w_c3"].shape[-1]
    assert K <= KP
    H2, W2 = H // 2, W // 2
    P1, P2 = W + 2, W2 + 2

    # Batch tile: largest divisor of N up to 8 (fat GEMM M, few grid steps).  On v7x one would
    # cap it so the grid keeps >= 2 steps and both TensorCores get work.
    bt = 1
    for cand in (8, 4, 2, 1):
        if N % cand == 0:
            bt = cand
            break
    G = N // bt

    bf16 = jnp.bfloat16
    f32 = jnp.float32

    # conv1 block weights: output lane order (w-parity j, w2, c1) so the pool is two lane halves.
    col1 = jnp.arange(W * C1, dtype=jnp.int32)
    j1 = col1 // (W2 * C1)
    w2_1 = (col1 % (W2 * C1)) // C1
    o1 = col1 % C1
    w1_big = _conv3x3_as_gemm_weight(params["w_b1"], P1, 2 * w2_1 + j1, o1).astype(bf16)
    b1_fat = jnp.tile(params["b_b1"], W).reshape(1, W * C1).astype(f32)

    # conv2 block weights: natural output lane order (w2, c2).
    col2 = jnp.arange(W2 * C2, dtype=jnp.int32)
    w2_big = _conv3x3_as_gemm_weight(params["w_b2"], P2, col2 // C2, col2 % C2).astype(bf16)
    b2_fat = jnp.tile(params["b_b2"], W2).reshape(1, W2 * C2).astype(f32)

    # classifier 1x1 convs; last layer padded to KP lanes (pad bias -1e30 => softmax ignores it).
    wc1 = params["w_c1"].astype(bf16)
    wc2 = params["w_c2"].astype(bf16)
    wc3 = jnp.pad(params["w_c3"], ((0, 0), (0, KP - K))).astype(bf16)
    bc1 = params["b_c1"].reshape(1, F).astype(f32)
    bc2 = params["b_c2"].reshape(1, F).astype(f32)
    bc3 = jnp.pad(params["b_c3"], (0, KP - K), constant_values=-1e30).reshape(1, KP).astype(f32)

    x2d = x_nhwc.reshape(N, H, W * C0)

    kernel = functools.partial(
        _fused_kernel, bt=bt, H=H, W=W, C0=C0, C1=C1, C2=C2, H2=H2, W2=W2, P1=P1, P2=P2)

    def full_spec(shape):
        return pl.BlockSpec(shape, lambda g, _s=shape: (0,) * len(_s))

    # VMEM footprint per step is well under 1 MiB (bf16 LHS buffers), so the default scoped VMEM
    # limit is fine on v5e/v6e/v7x; no explicit vmem_limit_bytes needed at these shapes.
    sm_w, lsm_w = pl.pallas_call(
        kernel,
        out_shape=(jax.ShapeDtypeStruct((W2, N, H2, KP), f32),
                   jax.ShapeDtypeStruct((W2, N, H2, KP), f32)),
        grid=(G,),
        in_specs=[
            pl.BlockSpec((bt, H, W * C0), lambda g: (g, 0, 0)),
            full_spec((3 * P1 * C0, W * C1)), full_spec((1, W * C1)),
            full_spec((3 * P2 * C1, W2 * C2)), full_spec((1, W2 * C2)),
            full_spec((C2, F)), full_spec((1, F)),
            full_spec((F, F)), full_spec((1, F)),
            full_spec((F, KP)), full_spec((1, KP)),
        ],
        out_specs=(pl.BlockSpec((W2, bt, H2, KP), lambda g: (0, g, 0, 0)),
                   pl.BlockSpec((W2, bt, H2, KP), lambda g: (0, g, 0, 0))),
        scratch_shapes=[
            pltpu.VMEM((bt * H, 3 * P1 * C0), bf16),     # lhs1
            pltpu.VMEM((bt * H, W * C1), f32),           # a1
            pltpu.VMEM((bt * H2, 3 * P2 * C1), bf16),    # lhs2
            pltpu.VMEM((bt * H2 * W2, C2), bf16),        # a2pix
        ],
        compiler_params=pltpu.CompilerParams(
            dimension_semantics=("parallel",)),          # batch tiles across TensorCores
    )(x2d, w1_big, b1_fat, w2_big, b2_fat, wc1, bc1, wc2, bc2, wc3, bc3)

    return sm_w, lsm_w, K


# ----------------------------------------------------------------------------
# Parameters (deterministic, matching PyTorch _initialize_weights:
# Conv2d weight ~ N(0, sqrt(2 / (kh*kw*out_channels))), bias = 0)
# ----------------------------------------------------------------------------
def init_params(key, num_input_channels=4, nclasses=2):
    ks = jax.random.split(key, 5)

    def conv_w(k, kh, kw, ci, co):
        n = kh * kw * co
        return jax.random.normal(k, (kh, kw, ci, co), jnp.float32) * math.sqrt(2.0 / n)

    return {
        # base_model: cfg = [8, 'M', 16]
        "w_b1": conv_w(ks[0], 3, 3, num_input_channels, 8),
        "b_b1": jnp.zeros((8,), jnp.float32),
        "w_b2": conv_w(ks[1], 3, 3, 8, 16),
        "b_b2": jnp.zeros((16,), jnp.float32),
        # classifier 'rd1': 1x1 convs stored as (Cin, Cout) matrices
        "w_c1": conv_w(ks[2], 1, 1, 16, 128)[0, 0],
        "b_c1": jnp.zeros((128,), jnp.float32),
        "w_c2": conv_w(ks[3], 1, 1, 128, 128)[0, 0],
        "b_c2": jnp.zeros((128,), jnp.float32),
        "w_c3": conv_w(ks[4], 1, 1, 128, nclasses)[0, 0],
        "b_c3": jnp.zeros((nclasses,), jnp.float32),
    }


# ----------------------------------------------------------------------------
# Full forward (mirrors RegionDetector.forward, use_extra_classifier=False)
# ----------------------------------------------------------------------------
def region_detector_forward(x_nchw, params):
    # TODO(synk): training-only pieces (loss, optimizer, hard-negative mining) are not part
    # of the forward pass and are intentionally not implemented here.
    x = jnp.transpose(x_nchw, (0, 2, 3, 1)).astype(jnp.float32)   # NCHW -> NHWC
    sm_w, lsm_w, K = _region_detector_pallas(x, params)
    # kernel layout is (W2, N, H2, KP) with padded class lanes -> slice + transpose to NCHW.
    sm = jnp.transpose(sm_w[..., :K], (1, 3, 2, 0))
    lsm = jnp.transpose(lsm_w[..., :K], (1, 3, 2, 0))
    out = {"softmax": sm, "log_softmax": lsm}
    return out, None  # (out, out_extra) ; use_extra_classifier = False


# ----------------------------------------------------------------------------
# Pure-JAX reference (f32) for a sanity check
# ----------------------------------------------------------------------------
def reference_forward(x_nchw, params):
    x = jnp.transpose(x_nchw, (0, 2, 3, 1)).astype(jnp.float32)

    def conv(x, w, b):
        y = jax.lax.conv_general_dilated(
            x, w, window_strides=(1, 1), padding="SAME",
            dimension_numbers=("NHWC", "HWIO", "NHWC"))
        return jnp.maximum(y + b, 0.0)

    x = conv(x, params["w_b1"], params["b_b1"])
    x = jax.lax.reduce_window(x, -jnp.inf, jax.lax.max,
                              (1, 2, 2, 1), (1, 2, 2, 1), "VALID")
    x = conv(x, params["w_b2"], params["b_b2"])
    h = jnp.maximum(jnp.einsum("nhwc,cd->nhwd", x, params["w_c1"]) + params["b_c1"], 0.0)
    h = jnp.maximum(jnp.einsum("nhwc,cd->nhwd", h, params["w_c2"]) + params["b_c2"], 0.0)
    logits = jnp.einsum("nhwc,cd->nhwd", h, params["w_c3"]) + params["b_c3"]
    sm = jax.nn.softmax(logits, axis=-1)
    lsm = jax.nn.log_softmax(logits, axis=-1)
    return (jnp.transpose(sm, (0, 3, 1, 2)), jnp.transpose(lsm, (0, 3, 1, 2)))


if __name__ == "__main__":
    key = jax.random.PRNGKey(0)
    k_par, k_inp = jax.random.split(key)

    batch, cin, spatial, nclasses = 2, 4, 16, 2
    params = init_params(k_par, num_input_channels=cin, nclasses=nclasses)
    x = jax.random.normal(k_inp, (batch, cin, spatial, spatial), jnp.float32)

    fwd = jax.jit(region_detector_forward)
    out, out_extra = fwd(x, params)
    jax.block_until_ready(out["softmax"])
    jax.block_until_ready(out["log_softmax"])

    # Shape / sanity checks against PyTorch semantics.
    assert out["softmax"].shape == (batch, nclasses, spatial // 2, spatial // 2)
    assert out["log_softmax"].shape == (batch, nclasses, spatial // 2, spatial // 2)
    assert out_extra is None
    assert bool(jnp.all(jnp.isfinite(out["softmax"])))
    assert bool(jnp.all(jnp.isfinite(out["log_softmax"])))
    # softmax sums to 1 over classes; exp(log_softmax) == softmax (sm is computed as exp(lsm)).
    assert bool(jnp.allclose(jnp.sum(out["softmax"], axis=1), 1.0, atol=1e-3))
    assert bool(jnp.allclose(jnp.exp(out["log_softmax"]), out["softmax"], atol=1e-3))

    # Numerical check vs pure-f32 reference (loose tolerance: bf16 MXU operands).
    sm_expect, lsm_expect = reference_forward(x, params)
    assert bool(jnp.allclose(out["softmax"], sm_expect, atol=5e-2, rtol=5e-2))
    assert bool(jnp.allclose(out["log_softmax"], lsm_expect, atol=2e-1, rtol=2e-1))

    print("KERNEL_OK")
</pallas_src>

<mosaic_0001>
module attributes {stable_mosaic.version = 11 : i64} {
  func.func @_fused_kernel(%arg0: i32, %arg1: memref<2x16x64xf32, #tpu.memory_space<vmem>>, %arg2: memref<216x128xbf16, #tpu.memory_space<vmem>>, %arg3: memref<1x128xf32, #tpu.memory_space<vmem>>, %arg4: memref<240x128xbf16, #tpu.memory_space<vmem>>, %arg5: memref<1x128xf32, #tpu.memory_space<vmem>>, %arg6: memref<16x128xbf16, #tpu.memory_space<vmem>>, %arg7: memref<1x128xf32, #tpu.memory_space<vmem>>, %arg8: memref<128x128xbf16, #tpu.memory_space<vmem>>, %arg9: memref<1x128xf32, #tpu.memory_space<vmem>>, %arg10: memref<128x128xbf16, #tpu.memory_space<vmem>>, %arg11: memref<1x128xf32, #tpu.memory_space<vmem>>, %arg12: memref<8x2x8x128xf32, #tpu.memory_space<vmem>>, %arg13: memref<8x2x8x128xf32, #tpu.memory_space<vmem>>, %arg14: memref<32x216xbf16, #tpu.memory_space<vmem>>, %arg15: memref<32x128xf32, #tpu.memory_space<vmem>>, %arg16: memref<16x240xbf16, #tpu.memory_space<vmem>>, %arg17: memref<128x16xbf16, #tpu.memory_space<vmem>>) attributes {dimension_semantics = [#tpu.dimension_semantics<parallel>], iteration_bounds = array<i64: 1>, scalar_prefetch = 0 : i64, scratch_operands = 4 : i64, tpu.core_type = #tpu.core_type<tc>, window_params = [{transform_indices = @transform_0, window_bounds = array<i64: 2, 16, 64>}, {pipeline_mode = #tpu.pipeline_mode<synchronous>, transform_indices = @transform_1, window_bounds = array<i64: 216, 128>}, {pipeline_mode = #tpu.pipeline_mode<synchronous>, transform_indices = @transform_2, window_bounds = array<i64: 1, 128>}, {pipeline_mode = #tpu.pipeline_mode<synchronous>, transform_indices = @transform_3, window_bounds = array<i64: 240, 128>}, {pipeline_mode = #tpu.pipeline_mode<synchronous>, transform_indices = @transform_4, window_bounds = array<i64: 1, 128>}, {pipeline_mode = #tpu.pipeline_mode<synchronous>, transform_indices = @transform_5, window_bounds = array<i64: 16, 128>}, {pipeline_mode = #tpu.pipeline_mode<synchronous>, transform_indices = @transform_6, window_bounds = array<i64: 1, 128>}, {pipeline_mode = #tpu.pipeline_mode<synchronous>, transform_indices = @transform_7, window_bounds = array<i64: 128, 128>}, {pipeline_mode = #tpu.pipeline_mode<synchronous>, transform_indices = @transform_8, window_bounds = array<i64: 1, 128>}, {pipeline_mode = #tpu.pipeline_mode<synchronous>, transform_indices = @transform_9, window_bounds = array<i64: 128, 128>}, {pipeline_mode = #tpu.pipeline_mode<synchronous>, transform_indices = @transform_10, window_bounds = array<i64: 1, 128>}, {transform_indices = @transform_11, window_bounds = array<i64: 8, 2, 8, 128>}, {transform_indices = @transform_12, window_bounds = array<i64: 8, 2, 8, 128>}]} {
    %cst = arith.constant 0.000000e+00 : bf16
    %0 = vector.broadcast %cst : bf16 to vector<32x216xbf16>
    %c0 = arith.constant 0 : index
    %c0_0 = arith.constant 0 : index
    %1 = vector.load %arg14[%c0, %c0_0] : memref<32x216xbf16, #tpu.memory_space<vmem>>, vector<32x216xbf16>
    tpu.vector_store %arg14[%c0, %c0_0], %0 {strides = array<i32>} : memref<32x216xbf16, #tpu.memory_space<vmem>>, vector<32x216xbf16>,
    %c0_1 = arith.constant 0 : index
    %c0_2 = arith.constant 0 : index
    %c0_3 = arith.constant 0 : index
    %2 = vector.load %arg1[%c0_1, %c0_2, %c0_3] : memref<2x16x64xf32, #tpu.memory_space<vmem>>, vector<1x15x64xf32>
    %3 = vector.shape_cast %2 : vector<1x15x64xf32> to vector<15x64xf32>
    %4 = arith.truncf %3 : vector<15x64xf32> to vector<15x64xbf16>
    %c1 = arith.constant 1 : index
    %c4 = arith.constant 4 : index
    %5 = vector.load %arg14[%c1, %c4] : memref<32x216xbf16, #tpu.memory_space<vmem>>, vector<15x64xbf16>
    tpu.vector_store %arg14[%c1, %c4], %4 {strides = array<i32>} : memref<32x216xbf16, #tpu.memory_space<vmem>>, vector<15x64xbf16>,
    %c0_4 = arith.constant 0 : index
    %c0_5 = arith.constant 0 : index
    %c0_6 = arith.constant 0 : index
    %6 = vector.load %arg1[%c0_4, %c0_5, %c0_6] : memref<2x16x64xf32, #tpu.memory_space<vmem>>, vector<1x16x64xf32>
    %7 = vector.shape_cast %6 : vector<1x16x64xf32> to vector<16x64xf32>
    %8 = arith.truncf %7 : vector<16x64xf32> to vector<16x64xbf16>
    %c0_7 = arith.constant 0 : index
    %c76 = arith.constant 76 : index
    %9 = vector.load %arg14[%c0_7, %c76] : memref<32x216xbf16, #tpu.memory_space<vmem>>, vector<16x64xbf16>
    tpu.vector_store %arg14[%c0_7, %c76], %8 {strides = array<i32>} : memref<32x216xbf16, #tpu.memory_space<vmem>>, vector<16x64xbf16>,
    %c0_8 = arith.constant 0 : index
    %c1_9 = arith.constant 1 : index
    %c0_10 = arith.constant 0 : index
    %10 = vector.load %arg1[%c0_8, %c1_9, %c0_10] : memref<2x16x64xf32, #tpu.memory_space<vmem>>, vector<1x15x64xf32>
    %11 = vector.shape_cast %10 : vector<1x15x64xf32> to vector<15x64xf32>
    %12 = arith.truncf %11 : vector<15x64xf32> to vector<15x64xbf16>
    %c0_11 = arith.constant 0 : index
    %c148 = arith.constant 148 : index
    %13 = vector.load %arg14[%c0_11, %c148] : memref<32x216xbf16, #tpu.memory_space<vmem>>, vector<15x64xbf16>
    tpu.vector_store %arg14[%c0_11, %c148], %12 {strides = array<i32>} : memref<32x216xbf16, #tpu.memory_space<vmem>>, vector<15x64xbf16>,
    %c1_12 = arith.constant 1 : index
    %c0_13 = arith.constant 0 : index
    %c0_14 = arith.constant 0 : index
    %14 = vector.load %arg1[%c1_12, %c0_13, %c0_14] : memref<2x16x64xf32, #tpu.memory_space<vmem>>, vector<1x15x64xf32>
    %15 = vector.shape_cast %14 : vector<1x15x64xf32> to vector<15x64xf32>
    %16 = arith.truncf %15 : vector<15x64xf32> to vector<15x64xbf16>
    %c17 = arith.constant 17 : index
    %c4_15 = arith.constant 4 : index
    %17 = vector.load %arg14[%c17, %c4_15] : memref<32x216xbf16, #tpu.memory_space<vmem>>, vector<15x64xbf16>
    tpu.vector_store %arg14[%c17, %c4_15], %16 {strides = array<i32>} : memref<32x216xbf16, #tpu.memory_space<vmem>>, vector<15x64xbf16>,
    %c1_16 = arith.constant 1 : index
    %c0_17 = arith.constant 0 : index
    %c0_18 = arith.constant 0 : index
    %18 = vector.load %arg1[%c1_16, %c0_17, %c0_18] : memref<2x16x64xf32, #tpu.memory_space<vmem>>, vector<1x16x64xf32>
    %19 = vector.shape_cast %18 : vector<1x16x64xf32> to vector<16x64xf32>
    %20 = arith.truncf %19 : vector<16x64xf32> to vector<16x64xbf16>
    %c16 = arith.constant 16 : index
    %c76_19 = arith.constant 76 : index
    %21 = vector.load %arg14[%c16, %c76_19] : memref<32x216xbf16, #tpu.memory_space<vmem>>, vector<16x64xbf16>
    tpu.vector_store %arg14[%c16, %c76_19], %20 {strides = array<i32>} : memref<32x216xbf16, #tpu.memory_space<vmem>>, vector<16x64xbf16>,
    %c1_20 = arith.constant 1 : index
    %c1_21 = arith.constant 1 : index
    %c0_22 = arith.constant 0 : index
    %22 = vector.load %arg1[%c1_20, %c1_21, %c0_22] : memref<2x16x64xf32, #tpu.memory_space<vmem>>, vector<1x15x64xf32>
    %23 = vector.shape_cast %22 : vector<1x15x64xf32> to vector<15x64xf32>
    %24 = arith.truncf %23 : vector<15x64xf32> to vector<15x64xbf16>
    %c16_23 = arith.constant 16 : index
    %c148_24 = arith.constant 148 : index
    %25 = vector.load %arg14[%c16_23, %c148_24] : memref<32x216xbf16, #tpu.memory_space<vmem>>, vector<15x64xbf16>
    tpu.vector_store %arg14[%c16_23, %c148_24], %24 {strides = array<i32>} : memref<32x216xbf16, #tpu.memory_space<vmem>>, vector<15x64xbf16>,
    %c0_25 = arith.constant 0 : index
    %c0_26 = arith.constant 0 : index
    %26 = vector.load %arg14[%c0_25, %c0_26] : memref<32x216xbf16, #tpu.memory_space<vmem>>, vector<32x216xbf16>
    %c0_27 = arith.constant 0 : index
    %c0_28 = arith.constant 0 : index
    %27 = vector.load %arg2[%c0_27, %c0_28] : memref<216x128xbf16, #tpu.memory_space<vmem>>, vector<216x128xbf16>
    %cst_29 = arith.constant dense<0.000000e+00> : vector<32x128xf32>
    %28 = tpu.matmul %26, %27, %cst_29 {dimension_numbers = #tpu.dot_dimension_numbers<[1], [0], [0], [1], [0, 0, 1, 1], [], []>} : vector<32x216xbf16>, vector<216x128xbf16>, vector<32x128xf32> -> vector<32x128xf32>
    %c0_30 = arith.constant 0 : index
    %c0_31 = arith.constant 0 : index
    %29 = vector.load %arg3[%c0_30, %c0_31] : memref<1x128xf32, #tpu.memory_space<vmem>>, vector<1x128xf32>
    %30 = vector.broadcast %29 : vector<1x128xf32> to vector<32x128xf32>
    %31 = arith.addf %28, %30 : vector<32x128xf32>
    %cst_32 = arith.constant 0.000000e+00 : f32
    %32 = vector.broadcast %cst_32 : f32 to vector<32x128xf32>
    %33 = arith.maximumf %31, %32 : vector<32x128xf32>
    %c0_33 = arith.constant 0 : index
    %c0_34 = arith.constant 0 : index
    %34 = vector.load %arg15[%c0_33, %c0_34] : memref<32x128xf32, #tpu.memory_space<vmem>>, vector<32x128xf32>
    tpu.vector_store %arg15[%c0_33, %c0_34], %33 {strides = array<i32>} : memref<32x128xf32, #tpu.memory_space<vmem>>, vector<32x128xf32>,
    %c0_35 = arith.constant 0 : index
    %c0_36 = arith.constant 0 : index
    %35 = tpu.strided_load %arg15[%c0_35, %c0_36] {strides = array<i32: 2, 1>} : memref<32x128xf32, #tpu.memory_space<vmem>>, vector<16x128xf32>
    %c1_37 = arith.constant 1 : index
    %c0_38 = arith.constant 0 : index
    %36 = tpu.strided_load %arg15[%c1_37, %c0_38] {strides = array<i32: 2, 1>} : memref<32x128xf32, #tpu.memory_space<vmem>>, vector<16x128xf32>
    %37 = arith.maximumf %35, %36 : vector<16x128xf32>
    %38 = vector.extract_strided_slice %37 {offsets = [0, 0], sizes = [16, 64], strides = [1, 1]} : vector<16x128xf32> to vector<16x64xf32>
    %39 = vector.extract_strided_slice %37 {offsets = [0, 64], sizes = [16, 64], strides = [1, 1]} : vector<16x128xf32> to vector<16x64xf32>
    %40 = arith.maximumf %38, %39 : vector<16x64xf32>
    %cst_39 = arith.constant 0.000000e+00 : bf16
    %41 = vector.broadcast %cst_39 : bf16 to vector<16x240xbf16>
    %c0_40 = arith.constant 0 : index
    %c0_41 = arith.constant 0 : index
    %42 = vector.load %arg16[%c0_40, %c0_41] : memref<16x240xbf16, #tpu.memory_space<vmem>>, vector<16x240xbf16>
    tpu.vector_store %arg16[%c0_40, %c0_41], %41 {strides = array<i32>} : memref<16x240xbf16, #tpu.memory_space<vmem>>, vector<16x240xbf16>,
    %43 = vector.extract_strided_slice %40 {offsets = [0, 0], sizes = [7, 64], strides = [1, 1]} : vector<16x64xf32> to vector<7x64xf32>
    %44 = arith.truncf %43 : vector<7x64xf32> to vector<7x64xbf16>
    %c1_42 = arith.constant 1 : index
    %c8 = arith.constant 8 : index
    %45 = vector.load %arg16[%c1_42, %c8] : memref<16x240xbf16, #tpu.memory_space<vmem>>, vector<7x64xbf16>
    tpu.vector_store %arg16[%c1_42, %c8], %44 {strides = array<i32>} : memref<16x240xbf16, #tpu.memory_space<vmem>>, vector<7x64xbf16>,
    %46 = vector.extract_strided_slice %40 {offsets = [0, 0], sizes = [8, 64], strides = [1, 1]} : vector<16x64xf32> to vector<8x64xf32>
    %47 = arith.truncf %46 : vector<8x64xf32> to vector<8x64xbf16>
    %c0_43 = arith.constant 0 : index
    %c88 = arith.constant 88 : index
    %48 = vector.load %arg16[%c0_43, %c88] : memref<16x240xbf16, #tpu.memory_space<vmem>>, vector<8x64xbf16>
    tpu.vector_store %arg16[%c0_43, %c88], %47 {strides = array<i32>} : memref<16x240xbf16, #tpu.memory_space<vmem>>, vector<8x64xbf16>,
    %49 = vector.extract_strided_slice %40 {offsets = [1, 0], sizes = [7, 64], strides = [1, 1]} : vector<16x64xf32> to vector<7x64xf32>
    %50 = arith.truncf %49 : vector<7x64xf32> to vector<7x64xbf16>
    %c0_44 = arith.constant 0 : index
    %c168 = arith.constant 168 : index
    %51 = vector.load %arg16[%c0_44, %c168] : memref<16x240xbf16, #tpu.memory_space<vmem>>, vector<7x64xbf16>
    tpu.vector_store %arg16[%c0_44, %c168], %50 {strides = array<i32>} : memref<16x240xbf16, #tpu.memory_space<vmem>>, vector<7x64xbf16>,
    %52 = vector.extract_strided_slice %40 {offsets = [8, 0], sizes = [7, 64], strides = [1, 1]} : vector<16x64xf32> to vector<7x64xf32>
    %53 = arith.truncf %52 : vector<7x64xf32> to vector<7x64xbf16>
    %c9 = arith.constant 9 : index
    %c8_45 = arith.constant 8 : index
    %54 = vector.load %arg16[%c9, %c8_45] : memref<16x240xbf16, #tpu.memory_space<vmem>>, vector<7x64xbf16>
    tpu.vector_store %arg16[%c9, %c8_45], %53 {strides = array<i32>} : memref<16x240xbf16, #tpu.memory_space<vmem>>, vector<7x64xbf16>,
    %55 = vector.extract_strided_slice %40 {offsets = [8, 0], sizes = [8, 64], strides = [1, 1]} : vector<16x64xf32> to vector<8x64xf32>
    %56 = arith.truncf %55 : vector<8x64xf32> to vector<8x64xbf16>
    %c8_46 = arith.constant 8 : index
    %c88_47 = arith.constant 88 : index
    %57 = vector.load %arg16[%c8_46, %c88_47] : memref<16x240xbf16, #tpu.memory_space<vmem>>, vector<8x64xbf16>
    tpu.vector_store %arg16[%c8_46, %c88_47], %56 {strides = array<i32>} : memref<16x240xbf16, #tpu.memory_space<vmem>>, vector<8x64xbf16>,
    %58 = vector.extract_strided_slice %40 {offsets = [9, 0], sizes = [7, 64], strides = [1, 1]} : vector<16x64xf32> to vector<7x64xf32>
    %59 = arith.truncf %58 : vector<7x64xf32> to vector<7x64xbf16>
    %c8_48 = arith.constant 8 : index
    %c168_49 = arith.constant 168 : index
    %60 = vector.load %arg16[%c8_48, %c168_49] : memref<16x240xbf16, #tpu.memory_space<vmem>>, vector<7x64xbf16>
    tpu.vector_store %arg16[%c8_48, %c168_49], %59 {strides = array<i32>} : memref<16x240xbf16, #tpu.memory_space<vmem>>, vector<7x64xbf16>,
    %c0_50 = arith.constant 0 : index
    %c0_51 = arith.constant 0 : index
    %61 = vector.load %arg16[%c0_50, %c0_51] : memref<16x240xbf16, #tpu.memory_space<vmem>>, vector<16x240xbf16>
    %c0_52 = arith.constant 0 : index
    %c0_53 = arith.constant 0 : index
    %62 = vector.load %arg4[%c0_52, %c0_53] : memref<240x128xbf16, #tpu.memory_space<vmem>>, vector<240x128xbf16>
    %cst_54 = arith.constant dense<0.000000e+00> : vector<16x128xf32>
    %63 = tpu.matmul %61, %62, %cst_54 {dimension_numbers = #tpu.dot_dimension_numbers<[1], [0], [0], [1], [0, 0, 1, 1], [], []>} : vector<16x240xbf16>, vector<240x128xbf16>, vector<16x128xf32> -> vector<16x128xf32>
    %c0_55 = arith.constant 0 : index
    %c0_56 = arith.constant 0 : index
    %64 = vector.load %arg5[%c0_55, %c0_56] : memref<1x128xf32, #tpu.memory_space<vmem>>, vector<1x128xf32>
    %65 = vector.broadcast %64 : vector<1x128xf32> to vector<16x128xf32>
    %66 = arith.addf %63, %65 : vector<16x128xf32>
    %cst_57 = arith.constant 0.000000e+00 : f32
    %67 = vector.broadcast %cst_57 : f32 to vector<16x128xf32>
    %68 = arith.maximumf %66, %67 : vector<16x128xf32>
    %69 = vector.extract_strided_slice %68 {offsets = [0, 0], sizes = [16, 16], strides = [1, 1]} : vector<16x128xf32> to vector<16x16xf32>
    %70 = arith.truncf %69 : vector<16x16xf32> to vector<16x16xbf16>
    %c0_58 = arith.constant 0 : index
    %c0_59 = arith.constant 0 : index
    %71 = vector.load %arg17[%c0_58, %c0_59] : memref<128x16xbf16, #tpu.memory_space<vmem>>, vector<16x16xbf16>
    tpu.vector_store %arg17[%c0_58, %c0_59], %70 {strides = array<i32>} : memref<128x16xbf16, #tpu.memory_space<vmem>>, vector<16x16xbf16>,
    %72 = vector.extract_strided_slice %68 {offsets = [0, 16], sizes = [16, 16], strides = [1, 1]} : vector<16x128xf32> to vector<16x16xf32>
    %73 = arith.truncf %72 : vector<16x16xf32> to vector<16x16xbf16>
    %c16_60 = arith.constant 16 : index
    %c0_61 = arith.constant 0 : index
    %74 = vector.load %arg17[%c16_60, %c0_61] : memref<128x16xbf16, #tpu.memory_space<vmem>>, vector<16x16xbf16>
    tpu.vector_store %arg17[%c16_60, %c0_61], %73 {strides = array<i32>} : memref<128x16xbf16, #tpu.memory_space<vmem>>, vector<16x16xbf16>,
    %75 = vector.extract_strided_slice %68 {offsets = [0, 32], sizes = [16, 16], strides = [1, 1]} : vector<16x128xf32> to vector<16x16xf32>
    %76 = arith.truncf %75 : vector<16x16xf32> to vector<16x16xbf16>
    %c32 = arith.constant 32 : index
    %c0_62 = arith.constant 0 : index
    %77 = vector.load %arg17[%c32, %c0_62] : memref<128x16xbf16, #tpu.memory_space<vmem>>, vector<16x16xbf16>
    tpu.vector_store %arg17[%c32, %c0_62], %76 {strides = array<i32>} : memref<128x16xbf16, #tpu.memory_space<vmem>>, vector<16x16xbf16>,
    %78 = vector.extract_strided_slice %68 {offsets = [0, 48], sizes = [16, 16], strides = [1, 1]} : vector<16x128xf32> to vector<16x16xf32>
    %79 = arith.truncf %78 : vector<16x16xf32> to vector<16x16xbf16>
    %c48 = arith.constant 48 : index
    %c0_63 = arith.constant 0 : index
    %80 = vector.load %arg17[%c48, %c0_63] : memref<128x16xbf16, #tpu.memory_space<vmem>>, vector<16x16xbf16>
    tpu.vector_store %arg17[%c48, %c0_63], %79 {strides = array<i32>} : memref<128x16xbf16, #tpu.memory_space<vmem>>, vector<16x16xbf16>,
    %81 = vector.extract_strided_slice %68 {offsets = [0, 64], sizes = [16, 16], strides = [1, 1]} : vector<16x128xf32> to vector<16x16xf32>
    %82 = arith.truncf %81 : vector<16x16xf32> to vector<16x16xbf16>
    %c64 = arith.constant 64 : index
    %c0_64 = arith.constant 0 : index
    %83 = vector.load %arg17[%c64, %c0_64] : memref<128x16xbf16, #tpu.memory_space<vmem>>, vector<16x16xbf16>
    tpu.vector_store %arg17[%c64, %c0_64], %82 {strides = array<i32>} : memref<128x16xbf16, #tpu.memory_space<vmem>>, vector<16x16xbf16>,
    %84 = vector.extract_strided_slice %68 {offsets = [0, 80], sizes = [16, 16], strides = [1, 1]} : vector<16x128xf32> to vector<16x16xf32>
    %85 = arith.truncf %84 : vector<16x16xf32> to vector<16x16xbf16>
    %c80 = arith.constant 80 : index
    %c0_65 = arith.constant 0 : index
    %86 = vector.load %arg17[%c80, %c0_65] : memref<128x16xbf16, #tpu.memory_space<vmem>>, vector<16x16xbf16>
    tpu.vector_store %arg17[%c80, %c0_65], %85 {strides = array<i32>} : memref<128x16xbf16, #tpu.memory_space<vmem>>, vector<16x16xbf16>,
    %87 = vector.extract_strided_slice %68 {offsets = [0, 96], sizes = [16, 16], strides = [1, 1]} : vector<16x128xf32> to vector<16x16xf32>
    %88 = arith.truncf %87 : vector<16x16xf32> to vector<16x16xbf16>
    %c96 = arith.constant 96 : index
    %c0_66 = arith.constant 0 : index
    %89 = vector.load %arg17[%c96, %c0_66] : memref<128x16xbf16, #tpu.memory_space<vmem>>, vector<16x16xbf16>
    tpu.vector_store %arg17[%c96, %c0_66], %88 {strides = array<i32>} : memref<128x16xbf16, #tpu.memory_space<vmem>>, vector<16x16xbf16>,
    %90 = vector.extract_strided_slice %68 {offsets = [0, 112], sizes = [16, 16], strides = [1, 1]} : vector<16x128xf32> to vector<16x16xf32>
    %91 = arith.truncf %90 : vector<16x16xf32> to vector<16x16xbf16>
    %c112 = arith.constant 112 : index
    %c0_67 = arith.constant 0 : index
    %92 = vector.load %arg17[%c112, %c0_67] : memref<128x16xbf16, #tpu.memory_space<vmem>>, vector<16x16xbf16>
    tpu.vector_store %arg17[%c112, %c0_67], %91 {strides = array<i32>} : memref<128x16xbf16, #tpu.memory_space<vmem>>, vector<16x16xbf16>,
    %c0_68 = arith.constant 0 : index
    %c0_69 = arith.constant 0 : index
    %93 = vector.load %arg17[%c0_68, %c0_69] : memref<128x16xbf16, #tpu.memory_space<vmem>>, vector<128x16xbf16>
    %c0_70 = arith.constant 0 : index
    %c0_71 = arith.constant 0 : index
    %94 = vector.load %arg6[%c0_70, %c0_71] : memref<16x128xbf16, #tpu.memory_space<vmem>>, vector<16x128xbf16>
    %cst_72 = arith.constant dense<0.000000e+00> : vector<128x128xf32>
    %95 = tpu.matmul %93, %94, %cst_72 {dimension_numbers = #tpu.dot_dimension_numbers<[1], [0], [0], [1], [0, 0, 1, 1], [], []>} : vector<128x16xbf16>, vector<16x128xbf16>, vector<128x128xf32> -> vector<128x128xf32>
    %c0_73 = arith.constant 0 : index
    %c0_74 = arith.constant 0 : index
    %96 = vector.load %arg7[%c0_73, %c0_74] : memref<1x128xf32, #tpu.memory_space<vmem>>, vector<1x128xf32>
    %97 = vector.broadcast %96 : vector<1x128xf32> to vector<128x128xf32>
    %98 = arith.addf %95, %97 : vector<128x128xf32>
    %cst_75 = arith.constant 0.000000e+00 : f32
    %99 = vector.broadcast %cst_75 : f32 to vector<128x128xf32>
    %100 = arith.maximumf %98, %99 : vector<128x128xf32>
    %101 = arith.truncf %100 : vector<128x128xf32> to vector<128x128xbf16>
    %c0_76 = arith.constant 0 : index
    %c0_77 = arith.constant 0 : index
    %102 = vector.load %arg8[%c0_76, %c0_77] : memref<128x128xbf16, #tpu.memory_space<vmem>>, vector<128x128xbf16>
    %cst_78 = arith.constant dense<0.000000e+00> : vector<128x128xf32>
    %103 = tpu.matmul %101, %102, %cst_78 {dimension_numbers = #tpu.dot_dimension_numbers<[1], [0], [0], [1], [0, 0, 1, 1], [], []>} : vector<128x128xbf16>, vector<128x128xbf16>, vector<128x128xf32> -> vector<128x128xf32>
    %c0_79 = arith.constant 0 : index
    %c0_80 = arith.constant 0 : index
    %104 = vector.load %arg9[%c0_79, %c0_80] : memref<1x128xf32, #tpu.memory_space<vmem>>, vector<1x128xf32>
    %105 = vector.broadcast %104 : vector<1x128xf32> to vector<128x128xf32>
    %106 = arith.addf %103, %105 : vector<128x128xf32>
    %cst_81 = arith.constant 0.000000e+00 : f32
    %107 = vector.broadcast %cst_81 : f32 to vector<128x128xf32>
    %108 = arith.maximumf %106, %107 : vector<128x128xf32>
    %109 = arith.truncf %108 : vector<128x128xf32> to vector<128x128xbf16>
    %c0_82 = arith.constant 0 : index
    %c0_83 = arith.constant 0 : index
    %110 = vector.load %arg10[%c0_82, %c0_83] : memref<128x128xbf16, #tpu.memory_space<vmem>>, vector<128x128xbf16>
    %cst_84 = arith.constant dense<0.000000e+00> : vector<128x128xf32>
    %111 = tpu.matmul %109, %110, %cst_84 {dimension_numbers = #tpu.dot_dimension_numbers<[1], [0], [0], [1], [0, 0, 1, 1], [], []>} : vector<128x128xbf16>, vector<128x128xbf16>, vector<128x128xf32> -> vector<128x128xf32>
    %c0_85 = arith.constant 0 : index
    %c0_86 = arith.constant 0 : index
    %112 = vector.load %arg11[%c0_85, %c0_86] : memref<1x128xf32, #tpu.memory_space<vmem>>, vector<1x128xf32>
    %113 = vector.broadcast %112 : vector<1x128xf32> to vector<128x128xf32>
    %114 = arith.addf %111, %113 : vector<128x128xf32>
    %cst_87 = arith.constant dense<0xFF800000> : vector<128xf32>
    %115 = vector.multi_reduction <maximumf>, %114, %cst_87 [1] : vector<128x128xf32> to vector<128xf32>
    %116 = vector.shape_cast %115 : vector<128xf32> to vector<128x1xf32>
    %117 = vector.broadcast %116 : vector<128x1xf32> to vector<128x128xf32>
    %118 = arith.subf %114, %117 : vector<128x128xf32>
    %119 = math.exp %118 : vector<128x128xf32>
    %cst_88 = arith.constant dense<0.000000e+00> : vector<128xf32>
    %120 = vector.multi_reduction <add>, %119, %cst_88 [1] : vector<128x128xf32> to vector<128xf32>
    %121 = vector.shape_cast %120 : vector<128xf32> to vector<128x1xf32>
    %122 = math.log %121 : vector<128x1xf32>
    %123 = vector.broadcast %122 : vector<128x1xf32> to vector<128x128xf32>
    %124 = arith.subf %118, %123 : vector<128x128xf32>
    %125 = math.exp %124 : vector<128x128xf32>
    %126 = vector.shape_cast %125 : vector<128x128xf32> to vector<8x2x8x128xf32>
    %c0_89 = arith.constant 0 : index
    %c0_90 = arith.constant 0 : index
    %c0_91 = arith.constant 0 : index
    %c0_92 = arith.constant 0 : index
    %127 = vector.load %arg12[%c0_89, %c0_90, %c0_91, %c0_92] : memref<8x2x8x128xf32, #tpu.memory_space<vmem>>, vector<8x2x8x128xf32>
    tpu.vector_store %arg12[%c0_89, %c0_90, %c0_91, %c0_92], %126 {strides = array<i32>} : memref<8x2x8x128xf32, #tpu.memory_space<vmem>>, vector<8x2x8x128xf32>,
    %128 = vector.shape_cast %124 : vector<128x128xf32> to vector<8x2x8x128xf32>
    %c0_93 = arith.constant 0 : index
    %c0_94 = arith.constant 0 : index
    %c0_95 = arith.constant 0 : index
    %c0_96 = arith.constant 0 : index
    %129 = vector.load %arg13[%c0_93, %c0_94, %c0_95, %c0_96] : memref<8x2x8x128xf32, #tpu.memory_space<vmem>>, vector<8x2x8x128xf32>
    tpu.vector_store %arg13[%c0_93, %c0_94, %c0_95, %c0_96], %128 {strides = array<i32>} : memref<8x2x8x128xf32, #tpu.memory_space<vmem>>, vector<8x2x8x128xf32>,
    return
  }
  func.func @transform_0(%arg0: i32) -> (i32, i32, i32) {
    %c0_i32 = arith.constant 0 : i32
    %c0_i32_0 = arith.constant 0 : i32
    %c0_i32_1 = arith.constant 0 : i32
    return %arg0, %c0_i32, %c0_i32_0 : i32, i32, i32
  }
  func.func @transform_1(%arg0: i32) -> (i32, i32) {
    %c0_i32 = arith.constant 0 : i32
    %c0_i32_0 = arith.constant 0 : i32
    %c0_i32_1 = arith.constant 0 : i32
    return %c0_i32, %c0_i32_0 : i32, i32
  }
  func.func @transform_2(%arg0: i32) -> (i32, i32) {
    %c0_i32 = arith.constant 0 : i32
    %c0_i32_0 = arith.constant 0 : i32
    %c0_i32_1 = arith.constant 0 : i32
    return %c0_i32, %c0_i32_0 : i32, i32
  }
  func.func @transform_3(%arg0: i32) -> (i32, i32) {
    %c0_i32 = arith.constant 0 : i32
    %c0_i32_0 = arith.constant 0 : i32
    %c0_i32_1 = arith.constant 0 : i32
    return %c0_i32, %c0_i32_0 : i32, i32
  }
  func.func @transform_4(%arg0: i32) -> (i32, i32) {
    %c0_i32 = arith.constant 0 : i32
    %c0_i32_0 = arith.constant 0 : i32
    %c0_i32_1 = arith.constant 0 : i32
    return %c0_i32, %c0_i32_0 : i32, i32
  }
  func.func @transform_5(%arg0: i32) -> (i32, i32) {
    %c0_i32 = arith.constant 0 : i32
    %c0_i32_0 = arith.constant 0 : i32
    %c0_i32_1 = arith.constant 0 : i32
    return %c0_i32, %c0_i32_0 : i32, i32
  }
  func.func @transform_6(%arg0: i32) -> (i32, i32) {
    %c0_i32 = arith.constant 0 : i32
    %c0_i32_0 = arith.constant 0 : i32
    %c0_i32_1 = arith.constant 0 : i32
    return %c0_i32, %c0_i32_0 : i32, i32
  }
  func.func @transform_7(%arg0: i32) -> (i32, i32) {
    %c0_i32 = arith.constant 0 : i32
    %c0_i32_0 = arith.constant 0 : i32
    %c0_i32_1 = arith.constant 0 : i32
    return %c0_i32, %c0_i32_0 : i32, i32
  }
  func.func @transform_8(%arg0: i32) -> (i32, i32) {
    %c0_i32 = arith.constant 0 : i32
    %c0_i32_0 = arith.constant 0 : i32
    %c0_i32_1 = arith.constant 0 : i32
    return %c0_i32, %c0_i32_0 : i32, i32
  }
  func.func @transform_9(%arg0: i32) -> (i32, i32) {
    %c0_i32 = arith.constant 0 : i32
    %c0_i32_0 = arith.constant 0 : i32
    %c0_i32_1 = arith.constant 0 : i32
    return %c0_i32, %c0_i32_0 : i32, i32
  }
  func.func @transform_10(%arg0: i32) -> (i32, i32) {
    %c0_i32 = arith.constant 0 : i32
    %c0_i32_0 = arith.constant 0 : i32
    %c0_i32_1 = arith.constant 0 : i32
    return %c0_i32, %c0_i32_0 : i32, i32
  }
  func.func @transform_11(%arg0: i32) -> (i32, i32, i32, i32) {
    %c0_i32 = arith.constant 0 : i32
    %c0_i32_0 = arith.constant 0 : i32
    %c0_i32_1 = arith.constant 0 : i32
    %c0_i32_2 = arith.constant 0 : i32
    return %c0_i32, %arg0, %c0_i32_0, %c0_i32_1 : i32, i32, i32, i32
  }
  func.func @transform_12(%arg0: i32) -> (i32, i32, i32, i32) {
    %c0_i32 = arith.constant 0 : i32
    %c0_i32_0 = arith.constant 0 : i32
    %c0_i32_1 = arith.constant 0 : i32
    %c0_i32_2 = arith.constant 0 : i32
    return %c0_i32, %arg0, %c0_i32_0, %c0_i32_1 : i32, i32, i32, i32
  }
}

</mosaic_0001>

<llo_original>
// kernel: tile.18
$region0: #{tile.18}
  #allocation0 [shape = 's32[1]{0}', space=sflag, size = 0x4, scoped, tag = 'scoped memory for tile.18']
  %s0 = inlined_call_operand.vmem [shape: f32[16], index: 0, kind: input, shape index: {}]
  %s1 = inlined_call_operand.vmem [shape: f32[8,16], index: 1, kind: output, shape index: {}]
  // Predicated region
  $region2: #{tile.18} parent=0 // pred_check
    _
  $region3: #{tile.18} parent=0 // pred_check_branch
    %3 = sbr.rel (0) target = $region5
  $region4: #{tile.18} parent=0 // pred_region
    _
  $region5: #{tile.18} parent=0 // pred_fallthru
    _
  %v4 = vld [vmem:[%s0] ss:$0 sm:$0xff]
  %5 = vst [vmem:[%s1] sm:$0xff] %v4

// kernel: tile.19
$region0: #{tile.19}
  %s0 = inlined_call_operand.vmem [shape: f32[8,16], index: 0, kind: input, shape index: {}]
  %s1 = inlined_call_operand.vmem [shape: f32[1,128], index: 1, kind: output, shape index: {}]
  $region1: #{tile.19} parent=0
    #allocation0 [shape = 'u8[4096]{0}', space=vmem, size = 0x1000, scoped, tag = 'scoped mem for output reshape']
    %v2 = vld [vmem:[%s0] sm:$0x1]
    %vm3 = vcmask 130048
    %4 = vst.msk [vmem:[#allocation0] sm:$0x1] %vm3, %v2
    %s5 = scalar_lea.vmem %s0, 7
    %v6 = vld [vmem:[%s5] sm:$0x1]
    %7 = vrot.lane.b32.xlu0 %v6, 112
    %v8 = vpop.permute.xlu0 %7
    %vm9 = vcmask 1048448
    %10 = vst.msk [vmem:[#allocation0] sm:$0x1] %vm9, %v8
    %s11 = scalar_lea.vmem %s0, 6
    %v12 = vld [vmem:[%s11] sm:$0x1]
    %13 = vrot.lane.b32.xlu0 %v12, 96
    %v14 = vpop.permute.xlu0 %13
    %vm15 = vcmask 917248
    %16 = vst.msk [vmem:[#allocation0] sm:$0x1] %vm15, %v14
    %s17 = scalar_lea.vmem %s0, 5
    %v18 = vld [vmem:[%s17] sm:$0x1]
    %19 = vrot.lane.b32.xlu0 %v18, 80
    %v20 = vpop.permute.xlu0 %19
    %vm21 = vcmask 786048
    %22 = vst.msk [vmem:[#allocation0] sm:$0x1] %vm21, %v20
    %s23 = scalar_lea.vmem %s0, 4
    %v24 = vld [vmem:[%s23] sm:$0x1]
    %25 = vrot.lane.b32.xlu0 %v24, 64
    %v26 = vpop.permute.xlu0 %25
    %vm27 = vcmask 654848
    %28 = vst.msk [vmem:[#allocation0] sm:$0x1] %vm27, %v26
    %s29 = scalar_lea.vmem %s0, 3
    %v30 = vld [vmem:[%s29] sm:$0x1]
    %31 = vrot.lane.b32.xlu0 %v30, 48
    %v32 = vpop.permute.xlu0 %31
    %vm33 = vcmask 523648
    %34 = vst.msk [vmem:[#allocation0] sm:$0x1] %vm33, %v32
    %s35 = scalar_lea.vmem %s0, 2
    %v36 = vld [vmem:[%s35] sm:$0x1]
    %37 = vrot.lane.b32.xlu0 %v36, 32
    %v38 = vpop.permute.xlu0 %37
    %vm39 = vcmask 392448
    %40 = vst.msk [vmem:[#allocation0] sm:$0x1] %vm39, %v38
    %s41 = scalar_lea.vmem %s0, 1
    %v42 = vld [vmem:[%s41] sm:$0x1]
    %43 = vrot.lane.b32.xlu0 %v42, 16
    %v44 = vpop.permute.xlu0 %43
    %vm45 = vcmask 261248
    %46 = vst.msk [vmem:[#allocation0] sm:$0x1] %vm45, %v44
    %s48 = sshllo.u32 0, 1
    %v50 = vld [vmem:[#allocation0] sm:%s48]
    %s51 = sshllo.u32 0, 1
    %52 = vst [vmem:[%s1] sm:%s51] %v50

// kernel: tile.13
$region0: #{tile.13}
  #allocation0 [shape = 's32[1]{0}', space=sflag, size = 0x4, scoped, tag = 'scoped memory for tile.13']
  %s0 = inlined_call_operand.vmem [shape: f32[8], index: 0, kind: input, shape index: {}]
  %s1 = inlined_call_operand.vmem [shape: f32[16,8], index: 1, kind: output, shape index: {}]
  // Predicated region
  $region2: #{tile.13} parent=0 // pred_check
    _
  $region3: #{tile.13} parent=0 // pred_check_branch
    %3 = sbr.rel (0) target = $region5
  $region4: #{tile.13} parent=0 // pred_region
    _
  $region5: #{tile.13} parent=0 // pred_fallthru
    _
  %v4 = vld [vmem:[%s0] ss:$0 sm:$0xff]
  %5 = vst [vmem:[%s1] sm:$0xff] %v4
  %s6 = scalar_lea.vmem %s1, 8
  %7 = vst [vmem:[%s6] sm:$0xff] %v4

// kernel: tile.14
$region0: #{tile.14}
  %s0 = inlined_call_operand.vmem [shape: f32[16,8], index: 0, kind: input, shape index: {}]
  %s1 = inlined_call_operand.vmem [shape: f32[1,128], index: 1, kind: output, shape index: {}]
  $region1: #{tile.14} parent=0
    #allocation0 [shape = 'u8[4096]{0}', space=vmem, size = 0x1000, scoped, tag = 'scoped mem for output reshape']
    %v2 = vld [vmem:[%s0] sm:$0x1]
    %vm3 = vcmask 64512
    %4 = vst.msk [vmem:[#allocation0] sm:$0x1] %vm3, %v2
    %s5 = scalar_lea.vmem %s0, 15
    %v6 = vld [vmem:[%s5] sm:$0x1]
    %7 = vrot.lane.b32.xlu0 %v6, 120
    %v8 = vpop.permute.xlu0 %7
    %vm9 = vcmask 1048512
    %10 = vst.msk [vmem:[#allocation0] sm:$0x1] %vm9, %v8
    %s11 = scalar_lea.vmem %s0, 14
    %v12 = vld [vmem:[%s11] sm:$0x1]
    %13 = vrot.lane.b32.xlu0 %v12, 112
    %v14 = vpop.permute.xlu0 %13
    %vm15 = vcmask 982912
    %16 = vst.msk [vmem:[#allocation0] sm:$0x1] %vm15, %v14
    %s17 = scalar_lea.vmem %s0, 13
    %v18 = vld [vmem:[%s17] sm:$0x1]
    %19 = vrot.lane.b32.xlu0 %v18, 104
    %v20 = vpop.permute.xlu0 %19
    %vm21 = vcmask 917312
    %22 = vst.msk [vmem:[#allocation0] sm:$0x1] %vm21, %v20
    %s23 = scalar_lea.vmem %s0, 12
    %v24 = vld [vmem:[%s23] sm:$0x1]
    %25 = vrot.lane.b32.xlu0 %v24, 96
    %v26 = vpop.permute.xlu0 %25
    %vm27 = vcmask 851712
    %28 = vst.msk [vmem:[#allocation0] sm:$0x1] %vm27, %v26
    %s29 = scalar_lea.vmem %s0, 11
    %v30 = vld [vmem:[%s29] sm:$0x1]
    %31 = vrot.lane.b32.xlu0 %v30, 88
    %v32 = vpop.permute.xlu0 %31
    %vm33 = vcmask 786112
    %34 = vst.msk [vmem:[#allocation0] sm:$0x1] %vm33, %v32
    %s35 = scalar_lea.vmem %s0, 10
    %v36 = vld [vmem:[%s35] sm:$0x1]
    %37 = vrot.lane.b32.xlu0 %v36, 80
    %v38 = vpop.permute.xlu0 %37
    %vm39 = vcmask 720512
    %40 = vst.msk [vmem:[#allocation0] sm:$0x1] %vm39, %v38
    %s41 = scalar_lea.vmem %s0, 9
    %v42 = vld [vmem:[%s41] sm:$0x1]
    %43 = vrot.lane.b32.xlu0 %v42, 72
    %v44 = vpop.permute.xlu0 %43
    %vm45 = vcmask 654912
    %46 = vst.msk [vmem:[#allocation0] sm:$0x1] %vm45, %v44
    %s47 = scalar_lea.vmem %s0, 8
    %v48 = vld [vmem:[%s47] sm:$0x1]
    %49 = vrot.lane.b32.xlu0 %v48, 64
    %v50 = vpop.permute.xlu0 %49
    %vm51 = vcmask 589312
    %52 = vst.msk [vmem:[#allocation0] sm:$0x1] %vm51, %v50
    %s53 = scalar_lea.vmem %s0, 7
    %v54 = vld [vmem:[%s53] sm:$0x1]
    %55 = vrot.lane.b32.xlu0 %v54, 56
    %v56 = vpop.permute.xlu0 %55
    %vm57 = vcmask 523712
    %58 = vst.msk [vmem:[#allocation0] sm:$0x1] %vm57, %v56
    %s59 = scalar_lea.vmem %s0, 6
    %v60 = vld [vmem:[%s59] sm:$0x1]
    %61 = vrot.lane.b32.xlu0 %v60, 48
    %v62 = vpop.permute.xlu0 %61
    %vm63 = vcmask 458112
    %64 = vst.msk [vmem:[#allocation0] sm:$0x1] %vm63, %v62
    %s65 = scalar_lea.vmem %s0, 5
    %v66 = vld [vmem:[%s65] sm:$0x1]
    %67 = vrot.lane.b32.xlu0 %v66, 40
    %v68 = vpop.permute.xlu0 %67
    %vm69 = vcmask 392512
    %70 = vst.msk [vmem:[#allocation0] sm:$0x1] %vm69, %v68
    %s71 = scalar_lea.vmem %s0, 4
    %v72 = vld [vmem:[%s71] sm:$0x1]
    %73 = vrot.lane.b32.xlu0 %v72, 32
    %v74 = vpop.permute.xlu0 %73
    %vm75 = vcmask 326912
    %76 = vst.msk [vmem:[#allocation0] sm:$0x1] %vm75, %v74
    %s77 = scalar_lea.vmem %s0, 3
    %v78 = vld [vmem:[%s77] sm:$0x1]
    %79 = vrot.lane.b32.xlu0 %v78, 24
    %v80 = vpop.permute.xlu0 %79
    %vm81 = vcmask 261312
    %82 = vst.msk [vmem:[#allocation0] sm:$0x1] %vm81, %v80
    %s83 = scalar_lea.vmem %s0, 2
    %v84 = vld [vmem:[%s83] sm:$0x1]
    %85 = vrot.lane.b32.xlu0 %v84, 16
    %v86 = vpop.permute.xlu0 %85
    %vm87 = vcmask 195712
    %88 = vst.msk [vmem:[#allocation0] sm:$0x1] %vm87, %v86
    %s89 = scalar_lea.vmem %s0, 1
    %v90 = vld [vmem:[%s89] sm:$0x1]
    %91 = vrot.lane.b32.xlu0 %v90, 8
    %v92 = vpop.permute.xlu0 %91
    %vm93 = vcmask 130112
    %94 = vst.msk [vmem:[#allocation0] sm:$0x1] %vm93, %v92
    %s96 = sshllo.u32 0, 1
    %v98 = vld [vmem:[#allocation0] sm:%s96]
    %s99 = sshllo.u32 0, 1
    %100 = vst [vmem:[%s1] sm:%s99] %v98

// kernel: region_detector_forward.1
$region0: #{region_detector_forward.1}
  #allocation0 [shape = 'u32[]', space=smem, size = 0x4, offset = 0x4, fixed_abs, tag = 'smem constant byte address 0x4 - core index']
  #allocation1 [shape = 'u32[144,128]{1,0:T(1,128)}', space=vmem, size = 0x12000, scoped, tag = 'internal scratch']
  #allocation2 [shape = 'bf16[32,216]{1,0:T(16,128)(2,1)}', space=vmem, size = 0x4000, scoped, tag = 'scratch operand']
  #allocation3 [shape = 'f32[32,128]{1,0:T(8,128)}', space=vmem, size = 0x4000, scoped, tag = 'scratch operand']
  #allocation4 [shape = 'bf16[16,240]{1,0:T(16,128)(2,1)}', space=vmem, size = 0x2000, scoped, tag = 'scratch operand']
  #allocation5 [shape = 'bf16[128,16]{1,0:T(16,128)(2,1)}', space=vmem, size = 0x8000, scoped, tag = 'scratch operand']
  %s0 = inlined_call_operand.vmem [shape: f32[2,16,64], index: 0, kind: input, shape index: {}]
  %s1 = inlined_call_operand.vmem [shape: bf16[216,128], index: 1, kind: input, shape index: {}]
  %s2 = inlined_call_operand.vmem [shape: f32[1,128], index: 2, kind: input, shape index: {}]
  %s3 = inlined_call_operand.vmem [shape: bf16[240,128], index: 3, kind: input, shape index: {}]
  %s4 = inlined_call_operand.vmem [shape: f32[1,128], index: 4, kind: input, shape index: {}]
  %s5 = inlined_call_operand.vmem [shape: bf16[16,128], index: 5, kind: input, shape index: {}]
  %s6 = inlined_call_operand.vmem [shape: f32[1,128], index: 6, kind: input, shape index: {}]
  %s7 = inlined_call_operand.vmem [shape: bf16[128,128], index: 7, kind: input, shape index: {}]
  %s8 = inlined_call_operand.vmem [shape: f32[1,128], index: 8, kind: input, shape index: {}]
  %s9 = inlined_call_operand.vmem [shape: bf16[128,128], index: 9, kind: input, shape index: {}]
  %s10 = inlined_call_operand.vmem [shape: f32[1,128], index: 10, kind: input, shape index: {}]
  %s11 = inlined_call_operand.vmem [shape: f32[8,2,8,128], index: 11, kind: output, shape index: {0}]
  %s12 = inlined_call_operand.vmem [shape: f32[8,2,8,128], index: 12, kind: output, shape index: {1}]
  %13 = xla_tuple %s11, %s12
  %s14 = sld [smem:[#allocation0]]
  $region62: #{region_detector_forward.1} parent=0
    _
  %s16 = ssub.s32 1, %s14
  %s17 = scalar_select 0, %s16, %s14
  // Predicated region
  $region2: #{region_detector_forward.1} parent=0 // pred_check
    _
  $region3: #{region_detector_forward.1} parent=0 // pred_check_branch
    %19 = sbr.rel (0) target = $region5
  $region4: #{region_detector_forward.1} parent=0 // pred_region
    _
  $region5: #{region_detector_forward.1} parent=0 // pred_fallthru
    _
  // Predicated region
  $region6: #{region_detector_forward.1} parent=0 // pred_check
    _
  $region7: #{region_detector_forward.1} parent=0 // pred_check_branch
    %21 = sbr.rel (0) target = $region9
  $region8: #{region_detector_forward.1} parent=0 // pred_region
    _
  $region9: #{region_detector_forward.1} parent=0 // pred_fallthru
    _
  // Predicated region
  $region10: #{region_detector_forward.1} parent=0 // pred_check
    _
  $region11: #{region_detector_forward.1} parent=0 // pred_check_branch
    %23 = sbr.rel (0) target = $region13
  $region12: #{region_detector_forward.1} parent=0 // pred_region
    _
  $region13: #{region_detector_forward.1} parent=0 // pred_fallthru
    _
  // Predicated region
  $region14: #{region_detector_forward.1} parent=0 // pred_check
    _
  $region15: #{region_detector_forward.1} parent=0 // pred_check_branch
    %25 = sbr.rel (0) target = $region17
  $region16: #{region_detector_forward.1} parent=0 // pred_region
    _
  $region17: #{region_detector_forward.1} parent=0 // pred_fallthru
    _
  // Predicated region
  $region18: #{region_detector_forward.1} parent=0 // pred_check
    _
  $region19: #{region_detector_forward.1} parent=0 // pred_check_branch
    %27 = sbr.rel (0) target = $region21
  $region20: #{region_detector_forward.1} parent=0 // pred_region
    _
  $region21: #{region_detector_forward.1} parent=0 // pred_fallthru
    _
  // Predicated region
  $region22: #{region_detector_forward.1} parent=0 // pred_check
    _
  $region23: #{region_detector_forward.1} parent=0 // pred_check_branch
    %29 = sbr.rel (0) target = $region25
  $region24: #{region_detector_forward.1} parent=0 // pred_region
    _
  $region25: #{region_detector_forward.1} parent=0 // pred_fallthru
    _
  // Predicated region
  $region26: #{region_detector_forward.1} parent=0 // pred_check
    _
  $region27: #{region_detector_forward.1} parent=0 // pred_check_branch
    %31 = sbr.rel (0) target = $region29
  $region28: #{region_detector_forward.1} parent=0 // pred_region
    _
  $region29: #{region_detector_forward.1} parent=0 // pred_fallthru
    _
  // Predicated region
  $region30: #{region_detector_forward.1} parent=0 // pred_check
    _
  $region31: #{region_detector_forward.1} parent=0 // pred_check_branch
    %33 = sbr.rel (0) target = $region33
  $region32: #{region_detector_forward.1} parent=0 // pred_region
    _
  $region33: #{region_detector_forward.1} parent=0 // pred_fallthru
    _
  // Predicated region
  $region34: #{region_detector_forward.1} parent=0 // pred_check
    _
  $region35: #{region_detector_forward.1} parent=0 // pred_check_branch
    %35 = sbr.rel (0) target = $region37
  $region36: #{region_detector_forward.1} parent=0 // pred_region
    _
  $region37: #{region_detector_forward.1} parent=0 // pred_fallthru
    _
  // Predicated region
  $region38: #{region_detector_forward.1} parent=0 // pred_check
    _
  $region39: #{region_detector_forward.1} parent=0 // pred_check_branch
    %37 = sbr.rel (0) target = $region41
  $region40: #{region_detector_forward.1} parent=0 // pred_region
    _
  $region41: #{region_detector_forward.1} parent=0 // pred_fallthru
    _
  // Predicated region
  $region42: #{region_detector_forward.1} parent=0 // pred_check
    _
  $region43: #{region_detector_forward.1} parent=0 // pred_check_branch
    %39 = sbr.rel (0) target = $region45
  $region44: #{region_detector_forward.1} parent=0 // pred_region
    _
  $region45: #{region_detector_forward.1} parent=0 // pred_fallthru
    _
  %41 = vst [vmem:[#allocation2] sm:$0xff] 0
  %vm42 = vcmask 719872
  %43 = vst.msk [vmem:[#allocation2 + $0x8] sm:$0xff] %vm42, 0
  %44 = vst [vmem:[#allocation2 + $0x10] sm:$0xff] 0
  %45 = vst.msk [vmem:[#allocation2 + $0x18] sm:$0xff] %vm42, 0
  %v46 = vld [vmem:[%s0] sm:$0xff]
  %v47 = vld [vmem:[%s0 + $0x8] sm:$0x7f]
  %v48 = vpack.c.bf16 %v47, %v46
  %v50 = vshrl.u32 %v48, 16
  %v52 = vrot.slane %v50, 7
  %v53 = vshll.u32 %v48, 16
  %v55 = vor.u32 %v52, %v53
  %56 = vrot.lane.b32.xlu0 %v55, 4
  %v57 = vpop.permute.xlu0 %56
  %vm59 = vcmask 556064
  %vm60 = vsmask.f32 7938
  %vm61 = vmand %vm59, %vm60
  %v62 = vld [vmem:[#allocation2] sm:$0xff]
  %v63 = vsel %vm61, %v57, %v62
  %64 = vst [vmem:[#allocation2] sm:$0xff] %v63
  %v65 = vld [vmem:[%s0] sm:$0xff]
  %v66 = vld [vmem:[%s0 + $0x8] sm:$0xff]
  %v67 = vpack.c.bf16 %v66, %v65
  %69 = vrot.lane.b32.xlu0 %v67, 76
  %v70 = vpop.permute.xlu0 %69
  %vm72 = vcmask 1048160
  %73 = vst.msk [vmem:[#allocation2] sm:$0xff] %vm72, %v70
  %vm74 = vcmask 97280
  %75 = vst.msk [vmem:[#allocation2 + $0x8] sm:$0xff] %vm74, %v70
  %v76 = vld [vmem:[%s0 + $0x1] sm:$0xff]
  %v77 = vld [vmem:[%s0 + $0x9] sm:$0x7f]
  %v78 = vpack.c.bf16 %v77, %v76
  %80 = vrot.lane.b32.xlu0 %v78, 20
  %v81 = vpop.permute.xlu0 %80
  %vm83 = vcmask 687264
  %vm84 = vsmask.f32 7424
  %vm85 = vmand %vm83, %vm84
  %v86 = vld [vmem:[#allocation2 + $0x8] sm:$0xff]
  %v87 = vsel %vm85, %v81, %v86
  %88 = vst [vmem:[#allocation2 + $0x8] sm:$0xff] %v87
  %s89 = scalar_lea.vmem %s0, 16
  %v90 = vld [vmem:[%s89] sm:$0xff]
  %v91 = vld [vmem:[%s89 + $0x8] sm:$0x7f]
  %v92 = vpack.c.bf16 %v91, %v90
  %v94 = vshrl.u32 %v92, 16
  %v96 = vrot.slane %v94, 7
  %v97 = vshll.u32 %v92, 16
  %v99 = vor.u32 %v96, %v97
  %100 = vrot.lane.b32.xlu0 %v99, 4
  %v101 = vpop.permute.xlu0 %100
  %v103 = vld [vmem:[#allocation2 + $0x10] sm:$0xff]
  %v104 = vsel %vm61, %v101, %v103
  %105 = vst [vmem:[#allocation2 + $0x10] sm:$0xff] %v104
  %v106 = vld [vmem:[%s89] sm:$0xff]
  %v107 = vld [vmem:[%s89 + $0x8] sm:$0xff]
  %v108 = vpack.c.bf16 %v107, %v106
  %110 = vrot.lane.b32.xlu0 %v108, 76
  %v111 = vpop.permute.xlu0 %110
  %113 = vst.msk [vmem:[#allocation2 + $0x10] sm:$0xff] %vm72, %v111
  %114 = vst.msk [vmem:[#allocation2 + $0x18] sm:$0xff] %vm74, %v111
  %v115 = vld [vmem:[%s89 + $0x1] sm:$0xff]
  %v116 = vld [vmem:[%s89 + $0x9] sm:$0x7f]
  %v117 = vpack.c.bf16 %v116, %v115
  %119 = vrot.lane.b32.xlu0 %v117, 20
  %v120 = vpop.permute.xlu0 %119
  %v122 = vld [vmem:[#allocation2 + $0x18] sm:$0xff]
  %v123 = vsel %vm85, %v120, %v122
  %124 = vst [vmem:[#allocation2 + $0x18] sm:$0xff] %v123
  %v125 = vld [vmem:[#allocation2] sm:$0xff]
  %v126 = vld [vmem:[#allocation2 + $0x8] sm:$0xff]
  %v127 = vld [vmem:[#allocation2 + $0x10] sm:$0xff]
  %v128 = vld [vmem:[#allocation2 + $0x18] sm:$0xff]
  %v129 = vld [vmem:[%s1] sm:$0xf]
  %v130 = vld [vmem:[%s1 + $0x4] sm:$0xf]
  %v131 = vld [vmem:[%s1 + $0x8] sm:$0xf]
  %v132 = vld [vmem:[%s1 + $0xc] sm:$0xf]
  %v133 = vld [vmem:[%s1 + $0x10] sm:$0xf]
  %v134 = vld [vmem:[%s1 + $0x14] sm:$0xf]
  %v135 = vld [vmem:[%s1 + $0x18] sm:$0xf]
  %v136 = vld [vmem:[%s1 + $0x1c] sm:$0xf]
  %v137 = vld [vmem:[%s1 + $0x20] sm:$0xf]
  %v138 = vld [vmem:[%s1 + $0x24] sm:$0xf]
  %v139 = vld [vmem:[%s1 + $0x28] sm:$0xf]
  %v140 = vld [vmem:[%s1 + $0x2c] sm:$0xf]
  %v141 = vld [vmem:[%s1 + $0x30] sm:$0xf]
  %v142 = vld [vmem:[%s1 + $0x34] sm:$0xf]
  %v143 = vld [vmem:[%s1 + $0x38] sm:$0xf]
  %v144 = vld [vmem:[%s1 + $0x3c] sm:$0xf]
  %v145 = vld [vmem:[%s1 + $0x40] sm:$0xf]
  %v146 = vld [vmem:[%s1 + $0x44] sm:$0xf]
  %v147 = vld [vmem:[%s1 + $0x48] sm:$0xf]
  %v148 = vld [vmem:[%s1 + $0x4c] sm:$0xf]
  %v149 = vld [vmem:[%s1 + $0x50] sm:$0xf]
  %v150 = vld [vmem:[%s1 + $0x54] sm:$0xf]
  %v151 = vld [vmem:[%s1 + $0x58] sm:$0xf]
  %v152 = vld [vmem:[%s1 + $0x5c] sm:$0xf]
  %v153 = vld [vmem:[%s1 + $0x60] sm:$0xf]
  %v154 = vld [vmem:[%s1 + $0x64] sm:$0xf]
  %v155 = vld [vmem:[%s1 + $0x68] sm:$0xf]
  %v156 = vld [vmem:[%s2] sm:$0x1]
  %v158 = vlaneseq
  %v159 = vshrl.u32 %v158, 7
  %v160 = vsub.s32 0, %v159
  %v161 = vrot.slane %v156, %v160
  %v190 = vunpack.c.l.b16 %v129
  %v191 = vunpack.c.l.b16 %v130
  %v192 = vunpack.c.l.b16 %v131
  %v193 = vunpack.c.l.b16 %v132
  %v194 = vunpack.c.l.b16 %v133
  %v195 = vunpack.c.l.b16 %v134
  %v196 = vunpack.c.l.b16 %v135
  %v197 = vunpack.c.l.b16 %v136
  %v198 = vunpack.c.l.b16 %v137
  %v199 = vunpack.c.l.b16 %v138
  %v200 = vunpack.c.l.b16 %v139
  %v201 = vunpack.c.l.b16 %v140
  %v202 = vunpack.c.l.b16 %v141
  %v203 = vunpack.c.l.b16 %v142
  %v204 = vunpack.c.l.b16 %v143
  %v205 = vunpack.c.l.b16 %v144
  %v206 = vunpack.c.l.b16 %v145
  %v207 = vunpack.c.l.b16 %v146
  %v208 = vunpack.c.l.b16 %v147
  %v209 = vunpack.c.l.b16 %v148
  %v210 = vunpack.c.l.b16 %v149
  %v211 = vunpack.c.l.b16 %v150
  %v212 = vunpack.c.l.b16 %v151
  %v213 = vunpack.c.l.b16 %v152
  %v214 = vunpack.c.l.b16 %v153
  %v215 = vunpack.c.l.b16 %v154
  %v216 = vunpack.c.l.b16 %v155
  %v217 = vpack.c.b16 %v191, %v190
  %v218 = vpack.c.b16 %v193, %v192
  %v219 = vpack.c.b16 %v195, %v194
  %v220 = vpack.c.b16 %v197, %v196
  %v221 = vpack.c.b16 %v199, %v198
  %v222 = vpack.c.b16 %v201, %v200
  %v223 = vpack.c.b16 %v203, %v202
  %v224 = vpack.c.b16 %v205, %v204
  %v225 = vpack.c.b16 %v207, %v206
  %v226 = vpack.c.b16 %v209, %v208
  %v227 = vpack.c.b16 %v211, %v210
  %v228 = vpack.c.b16 %v213, %v212
  %v229 = vpack.c.b16 %v215, %v214
  %v230 = vpack.c.b16 %v216, %v216
  %v245 = vsel %vm42, %v126, 0
  %v248 = vsel %vm42, %v128, 0
  %vm250 = vcmask 1043456
  %v252 = vsel %vm250, %v230, 0
  %254 = vmatprep.subr.bf16.mxu0 0
  %255 = vmatpush1.bf16.msra.mxu0 %v217
  %256 = vmatprep.subr.bf16.mxu0 0
  %257 = vmatpush1.bf16.msra.mxu0 %v218
  %258 = vmatprep.subr.bf16.mxu0 0
  %259 = vmatpush1.bf16.msra.mxu0 %v219
  %260 = vmatprep.subr.bf16.mxu0 0
  %261 = vmatpush1.bf16.msra.mxu0 %v220
  %262 = vmatprep.subr.bf16.mxu0 0
  %263 = vmatpush1.bf16.msra.mxu0 %v221
  %264 = vmatprep.subr.bf16.mxu0 0
  %265 = vmatpush1.bf16.msra.mxu0 %v222
  %266 = vmatprep.subr.bf16.mxu0 0
  %267 = vmatpush1.bf16.msra.mxu0 %v223
  %268 = vmatprep.subr.bf16.mxu0 0
  %269 = vmatpush1.bf16.msra.mxu0 %v224
  %270 = vmatprep.subr.bf16.mxu0 0
  %271 = vmatpush1.bf16.msra.mxu0 %v225
  %272 = vmatprep.subr.bf16.mxu0 0
  %273 = vmatpush1.bf16.msra.mxu0 %v226
  %274 = vmatprep.subr.bf16.mxu0 0
  %275 = vmatpush1.bf16.msra.mxu0 %v227
  %276 = vmatprep.subr.bf16.mxu0 0
  %277 = vmatpush1.bf16.msra.mxu0 %v228
  %278 = vmatprep.subr.bf16.mxu0 0
  %279 = vmatpush1.bf16.msra.mxu0 %v229
  %280 = vmatprep.subr.bf16.mxu0 0
  %281 = vmatpush1.bf16.msra.mxu0 %v252
  %282 = vmatprep.subr.bf16.mxu0 0
  %283 = vmatpush1.bf16.msra.mxu0 0
  %284 = vmatprep.subr.bf16.mxu0 0
  %285 = vmatpush1.bf16.msra.mxu0 0
  %286 = vmatprep.mubr.bf16.mxu0 %v245
  %287 = vmatmul.mubr.bf16.gmra.mrb[0].mxu0 %v125
  %v288 = vpop.f32.mrb[0].mxu0
  %v289 = vadd.f32 %v161, %v288
  %v290 = vpop.f32.mrb[0].mxu0
  %v291 = vpop.f32.mrb[0].mxu0
  %v292 = vadd.f32 %v161, %v291
  %v293 = vpop.f32.mrb[0].mxu0
  %294 = vmatprep.mubr.bf16.mxu0 %v248
  %295 = vmatmul.mubr.bf16.gmra.mrb[0].mxu0 %v127
  %v296 = vpop.f32.mrb[0].mxu0
  %v297 = vadd.f32 %v161, %v296
  %v298 = vpop.f32.mrb[0].mxu0
  %v299 = vpop.f32.mrb[0].mxu0
  %v300 = vadd.f32 %v161, %v299
  %v301 = vpop.f32.mrb[0].mxu0
  %302 = vdwg.mxu0
  %v303 = vmax.f32 %v289, 0.0
  %v304 = vmax.f32 %v292, 0.0
  %v305 = vmax.f32 %v297, 0.0
  %v306 = vmax.f32 %v300, 0.0
  %307 = vst [vmem:[#allocation3] sm:$0xff] %v303
  %308 = vst [vmem:[#allocation3 + $0x8] sm:$0xff] %v304
  %309 = vst [vmem:[#allocation3 + $0x10] sm:$0xff] %v305
  %310 = vst [vmem:[#allocation3 + $0x18] sm:$0xff] %v306
  %v311 = vld [vmem:[#allocation3] ss:$2 sm:$0xff]
  %s312 = scalar_lea.vmem [#allocation3], 16
  %v313 = vld [vmem:[%s312] ss:$2 sm:$0xff]
  %s314 = scalar_lea.vmem [#allocation3], 1
  %v315 = vld [vmem:[%s314] ss:$2 sm:$0xff]
  %s316 = scalar_lea.vmem [#allocation3], 17
  %v317 = vld [vmem:[%s316] ss:$2 sm:$0xff]
  %v318 = vmax.f32 %v311, %v315
  %v319 = vmax.f32 %v313, %v317
  %322 = vrot.lane.b32.xlu0 %v318, 64
  %v323 = vpop.permute.xlu0 %322
  %324 = vrot.lane.b32.xlu0 %v319, 64
  %v325 = vpop.permute.xlu0 %324
  %v328 = vmax.f32 %v318, %v323
  %v329 = vmax.f32 %v319, %v325
  %330 = vst [vmem:[#allocation4] sm:$0xff] 0
  %vm331 = vcmask 916480
  %332 = vst.msk [vmem:[#allocation4 + $0x8] sm:$0xff] %vm331, 0
  %v333 = vpack.c.bf16 %v328, %v328
  %v335 = vshrl.u32 %v333, 16
  %v337 = vrot.slane %v335, 7
  %v338 = vshll.u32 %v333, 16
  %v340 = vor.u32 %v337, %v338
  %341 = vrot.lane.b32.xlu0 %v340, 8
  %v342 = vpop.permute.xlu0 %341
  %vm344 = vcmask 584768
  %vm345 = vmand %vm344, %vm60
  %v346 = vld [vmem:[#allocation4] sm:$0xf]
  %v347 = vsel %vm345, %v342, %v346
  %348 = vst [vmem:[#allocation4] sm:$0xf] %v347
  %350 = vrot.lane.b32.xlu0 %v333, 88
  %v351 = vpop.permute.xlu0 %350
  %vm353 = vcmask 1044160
  %354 = vst.msk [vmem:[#allocation4] sm:$0xf] %vm353, %v351
  %vm355 = vcmask 191488
  %356 = vst.msk [vmem:[#allocation4 + $0x8] sm:$0xf] %vm355, %v351
  %v357 = vrot.slane %v338, 1
  %v358 = vor.u32 %v335, %v357
  %359 = vrot.lane.b32.xlu0 %v358, 40
  %v360 = vpop.permute.xlu0 %359
  %vm362 = vcmask 847168
  %vm363 = vsmask.f32 3328
  %vm364 = vmand %vm362, %vm363
  %v365 = vld [vmem:[#allocation4 + $0x8] sm:$0xf]
  %v366 = vsel %vm364, %v360, %v365
  %367 = vst [vmem:[#allocation4 + $0x8] sm:$0xf] %v366
  %v368 = vpack.c.bf16 %v329, %v329
  %v370 = vshrl.u32 %v368, 16
  %v372 = vrot.slane %v370, 3
  %v373 = vshll.u32 %v368, 16
  %v375 = vrot.slane %v373, 4
  %v376 = vor.u32 %v372, %v375
  %377 = vrot.lane.b32.xlu0 %v376, 8
  %v378 = vpop.permute.xlu0 %377
  %vm380 = vcmask 588868
  %vm381 = vsmask.f32 7954
  %vm382 = vmand %vm380, %vm381
  %v383 = vld [vmem:[#allocation4] sm:$0xf0]
  %v384 = vsel %vm382, %v378, %v383
  %385 = vst [vmem:[#allocation4] sm:$0xf0] %v384
  %v387 = vrot.slane %v368, 4
  %388 = vrot.lane.b32.xlu0 %v387, 88
  %v389 = vpop.permute.xlu0 %388
  %vm391 = vcmask 1048260
  %392 = vst.msk [vmem:[#allocation4] sm:$0xf0] %vm391, %v389
  %vm393 = vcmask 195588
  %394 = vst.msk [vmem:[#allocation4 + $0x8] sm:$0xf0] %vm393, %v389
  %v395 = vrot.slane %v370, 4
  %v396 = vrot.slane %v373, 5
  %v397 = vor.u32 %v395, %v396
  %398 = vrot.lane.b32.xlu0 %v397, 40
  %v399 = vpop.permute.xlu0 %398
  %vm401 = vcmask 851268
  %vm402 = vmand %vm401, %vm84
  %v403 = vld [vmem:[#allocation4 + $0x8] sm:$0xf0]
  %v404 = vsel %vm402, %v399, %v403
  %405 = vst [vmem:[#allocation4 + $0x8] sm:$0xf0] %v404
  %v406 = vld [vmem:[#allocation4] sm:$0xff]
  %v407 = vld [vmem:[#allocation4 + $0x8] sm:$0xff]
  %v408 = vld [vmem:[%s3] sm:$0xf]
  %v409 = vld [vmem:[%s3 + $0x4] sm:$0xf]
  %v410 = vld [vmem:[%s3 + $0x8] sm:$0xf]
  %v411 = vld [vmem:[%s3 + $0xc] sm:$0xf]
  %v412 = vld [vmem:[%s3 + $0x10] sm:$0xf]
  %v413 = vld [vmem:[%s3 + $0x14] sm:$0xf]
  %v414 = vld [vmem:[%s3 + $0x18] sm:$0xf]
  %v415 = vld [vmem:[%s3 + $0x1c] sm:$0xf]
  %v416 = vld [vmem:[%s3 + $0x20] sm:$0xf]
  %v417 = vld [vmem:[%s3 + $0x24] sm:$0xf]
  %v418 = vld [vmem:[%s3 + $0x28] sm:$0xf]
  %v419 = vld [vmem:[%s3 + $0x2c] sm:$0xf]
  %v420 = vld [vmem:[%s3 + $0x30] sm:$0xf]
  %v421 = vld [vmem:[%s3 + $0x34] sm:$0xf]
  %v422 = vld [vmem:[%s3 + $0x38] sm:$0xf]
  %v423 = vld [vmem:[%s3 + $0x3c] sm:$0xf]
  %v424 = vld [vmem:[%s3 + $0x40] sm:$0xf]
  %v425 = vld [vmem:[%s3 + $0x44] sm:$0xf]
  %v426 = vld [vmem:[%s3 + $0x48] sm:$0xf]
  %v427 = vld [vmem:[%s3 + $0x4c] sm:$0xf]
  %v428 = vld [vmem:[%s3 + $0x50] sm:$0xf]
  %v429 = vld [vmem:[%s3 + $0x54] sm:$0xf]
  %v430 = vld [vmem:[%s3 + $0x58] sm:$0xf]
  %v431 = vld [vmem:[%s3 + $0x5c] sm:$0xf]
  %v432 = vld [vmem:[%s3 + $0x60] sm:$0xf]
  %v433 = vld [vmem:[%s3 + $0x64] sm:$0xf]
  %v434 = vld [vmem:[%s3 + $0x68] sm:$0xf]
  %v435 = vld [vmem:[%s3 + $0x6c] sm:$0xf]
  %v436 = vld [vmem:[%s3 + $0x70] sm:$0xf]
  %v437 = vld [vmem:[%s3 + $0x74] sm:$0xf]
  %v438 = vld [vmem:[%s4] sm:$0x1]
  %v440 = vlaneseq
  %v441 = vshrl.u32 %v440, 7
  %v442 = vsub.s32 0, %v441
  %v443 = vrot.slane %v438, %v442
  %v475 = vunpack.c.l.b16 %v408
  %v476 = vunpack.c.l.b16 %v409
  %v477 = vunpack.c.l.b16 %v410
  %v478 = vunpack.c.l.b16 %v411
  %v479 = vunpack.c.l.b16 %v412
  %v480 = vunpack.c.l.b16 %v413
  %v481 = vunpack.c.l.b16 %v414
  %v482 = vunpack.c.l.b16 %v415
  %v483 = vunpack.c.l.b16 %v416
  %v484 = vunpack.c.l.b16 %v417
  %v485 = vunpack.c.l.b16 %v418
  %v486 = vunpack.c.l.b16 %v419
  %v487 = vunpack.c.l.b16 %v420
  %v488 = vunpack.c.l.b16 %v421
  %v489 = vunpack.c.l.b16 %v422
  %v490 = vunpack.c.l.b16 %v423
  %v491 = vunpack.c.l.b16 %v424
  %v492 = vunpack.c.l.b16 %v425
  %v493 = vunpack.c.l.b16 %v426
  %v494 = vunpack.c.l.b16 %v427
  %v495 = vunpack.c.l.b16 %v428
  %v496 = vunpack.c.l.b16 %v429
  %v497 = vunpack.c.l.b16 %v430
  %v498 = vunpack.c.l.b16 %v431
  %v499 = vunpack.c.l.b16 %v432
  %v500 = vunpack.c.l.b16 %v433
  %v501 = vunpack.c.l.b16 %v434
  %v502 = vunpack.c.l.b16 %v435
  %v503 = vunpack.c.l.b16 %v436
  %v504 = vunpack.c.l.b16 %v437
  %v505 = vpack.c.b16 %v476, %v475
  %v506 = vpack.c.b16 %v478, %v477
  %v507 = vpack.c.b16 %v480, %v479
  %v508 = vpack.c.b16 %v482, %v481
  %v509 = vpack.c.b16 %v484, %v483
  %v510 = vpack.c.b16 %v486, %v485
  %v511 = vpack.c.b16 %v488, %v487
  %v512 = vpack.c.b16 %v490, %v489
  %v513 = vpack.c.b16 %v492, %v491
  %v514 = vpack.c.b16 %v494, %v493
  %v515 = vpack.c.b16 %v496, %v495
  %v516 = vpack.c.b16 %v498, %v497
  %v517 = vpack.c.b16 %v500, %v499
  %v518 = vpack.c.b16 %v502, %v501
  %v519 = vpack.c.b16 %v504, %v503
  %v536 = vsel %vm331, %v407, 0
  %538 = vmatprep.subr.bf16.mxu0 0
  %539 = vmatpush1.bf16.msra.mxu0 %v505
  %540 = vmatprep.subr.bf16.mxu0 0
  %541 = vmatpush1.bf16.msra.mxu0 %v506
  %542 = vmatprep.subr.bf16.mxu0 0
  %543 = vmatpush1.bf16.msra.mxu0 %v507
  %544 = vmatprep.subr.bf16.mxu0 0
  %545 = vmatpush1.bf16.msra.mxu0 %v508
  %546 = vmatprep.subr.bf16.mxu0 0
  %547 = vmatpush1.bf16.msra.mxu0 %v509
  %548 = vmatprep.subr.bf16.mxu0 0
  %549 = vmatpush1.bf16.msra.mxu0 %v510
  %550 = vmatprep.subr.bf16.mxu0 0
  %551 = vmatpush1.bf16.msra.mxu0 %v511
  %552 = vmatprep.subr.bf16.mxu0 0
  %553 = vmatpush1.bf16.msra.mxu0 %v512
  %554 = vmatprep.subr.bf16.mxu0 0
  %555 = vmatpush1.bf16.msra.mxu0 %v513
  %556 = vmatprep.subr.bf16.mxu0 0
  %557 = vmatpush1.bf16.msra.mxu0 %v514
  %558 = vmatprep.subr.bf16.mxu0 0
  %559 = vmatpush1.bf16.msra.mxu0 %v515
  %560 = vmatprep.subr.bf16.mxu0 0
  %561 = vmatpush1.bf16.msra.mxu0 %v516
  %562 = vmatprep.subr.bf16.mxu0 0
  %563 = vmatpush1.bf16.msra.mxu0 %v517
  %564 = vmatprep.subr.bf16.mxu0 0
  %565 = vmatpush1.bf16.msra.mxu0 %v518
  %566 = vmatprep.subr.bf16.mxu0 0
  %567 = vmatpush1.bf16.msra.mxu0 %v519
  %568 = vmatprep.subr.bf16.mxu0 0
  %569 = vmatpush1.bf16.msra.mxu0 0
  %570 = vmatprep.mubr.bf16.mxu0 %v536
  %571 = vmatmul.mubr.bf16.gmra.mrb[0].mxu0 %v406
  %v572 = vpop.f32.mrb[0].mxu0
  %v573 = vadd.f32 %v443, %v572
  %v574 = vpop.f32.mrb[0].mxu0
  %v575 = vpop.f32.mrb[0].mxu0
  %v576 = vadd.f32 %v443, %v575
  %v577 = vpop.f32.mrb[0].mxu0
  %578 = vdwg.mxu0
  %v579 = vmax.f32 %v573, 0.0
  %v580 = vmax.f32 %v576, 0.0
  %v581 = vpack.c.bf16 %v580, %v579
  %vm582 = vcmask 130048
  %583 = vst.msk [vmem:[#allocation5] sm:$0xff] %vm582, %v581
  %585 = vrot.lane.b32.xlu0 %v581, 112
  %v586 = vpop.permute.xlu0 %585
  %588 = vst.msk [vmem:[#allocation5 + $0x8] sm:$0xff] %vm582, %v586
  %589 = vrot.lane.b32.xlu0 %v581, 96
  %v590 = vpop.permute.xlu0 %589
  %592 = vst.msk [vmem:[#allocation5 + $0x10] sm:$0xff] %vm582, %v590
  %593 = vrot.lane.b32.xlu0 %v581, 80
  %v594 = vpop.permute.xlu0 %593
  %596 = vst.msk [vmem:[#allocation5 + $0x18] sm:$0xff] %vm582, %v594
  %597 = vrot.lane.b32.xlu0 %v581, 64
  %v598 = vpop.permute.xlu0 %597
  %600 = vst.msk [vmem:[#allocation5 + $0x20] sm:$0xff] %vm582, %v598
  %601 = vrot.lane.b32.xlu0 %v581, 48
  %v602 = vpop.permute.xlu0 %601
  %604 = vst.msk [vmem:[#allocation5 + $0x28] sm:$0xff] %vm582, %v602
  %605 = vrot.lane.b32.xlu0 %v581, 32
  %v606 = vpop.permute.xlu0 %605
  %608 = vst.msk [vmem:[#allocation5 + $0x30] sm:$0xff] %vm582, %v606
  %609 = vrot.lane.b32.xlu0 %v581, 16
  %v610 = vpop.permute.xlu0 %609
  %612 = vst.msk [vmem:[#allocation5 + $0x38] sm:$0xff] %vm582, %v610
  %v613 = vld [vmem:[#allocation5] sm:$0xff]
  %v614 = vld [vmem:[#allocation5 + $0x8] sm:$0xff]
  %v615 = vld [vmem:[#allocation5 + $0x10] sm:$0xff]
  %v616 = vld [vmem:[#allocation5 + $0x18] sm:$0xff]
  %v617 = vld [vmem:[#allocation5 + $0x20] sm:$0xff]
  %v618 = vld [vmem:[#allocation5 + $0x28] sm:$0xff]
  %v619 = vld [vmem:[#allocation5 + $0x30] sm:$0xff]
  %v620 = vld [vmem:[#allocation5 + $0x38] sm:$0xff]
  %v621 = vld [vmem:[%s5] sm:$0xf]
  %v622 = vld [vmem:[%s5 + $0x4] sm:$0xf]
  %v623 = vld [vmem:[%s6] sm:$0x1]
  %v625 = vlaneseq
  %v626 = vshrl.u32 %v625, 7
  %v627 = vsub.s32 0, %v626
  %v628 = vrot.slane %v623, %v627
  %v632 = vunpack.c.l.b16 %v621
  %v633 = vunpack.c.l.b16 %v622
  %v634 = vpack.c.b16 %v633, %v632
  %v637 = vsel %vm582, %v613, 0
  %v640 = vsel %vm582, %v614, 0
  %v643 = vsel %vm582, %v615, 0
  %v646 = vsel %vm582, %v616, 0
  %v649 = vsel %vm582, %v617, 0
  %v652 = vsel %vm582, %v618, 0
  %v655 = vsel %vm582, %v619, 0
  %v658 = vsel %vm582, %v620, 0
  %660 = vmatprep.subr.bf16.mxu0 0
  %661 = vmatpush1.bf16.msra.mxu0 %v634
  %662 = vmatprep.subr.bf16.mxu0 0
  %663 = vmatpush1.bf16.msra.mxu0 0
  %664 = vmatprep.subr.bf16.mxu0 0
  %665 = vmatpush1.bf16.msra.mxu0 0
  %666 = vmatprep.subr.bf16.mxu0 0
  %667 = vmatpush1.bf16.msra.mxu0 0
  %668 = vmatprep.subr.bf16.mxu0 0
  %669 = vmatpush1.bf16.msra.mxu0 0
  %670 = vmatprep.subr.bf16.mxu0 0
  %671 = vmatpush1.bf16.msra.mxu0 0
  %672 = vmatprep.subr.bf16.mxu0 0
  %673 = vmatpush1.bf16.msra.mxu0 0
  %674 = vmatprep.subr.bf16.mxu0 0
  %675 = vmatpush1.bf16.msra.mxu0 0
  %676 = vmatprep.subr.bf16.mxu0 0
  %677 = vmatpush1.bf16.msra.mxu0 0
  %678 = vmatprep.subr.bf16.mxu0 0
  %679 = vmatpush1.bf16.msra.mxu0 0
  %680 = vmatprep.subr.bf16.mxu0 0
  %681 = vmatpush1.bf16.msra.mxu0 0
  %682 = vmatprep.subr.bf16.mxu0 0
  %683 = vmatpush1.bf16.msra.mxu0 0
  %684 = vmatprep.subr.bf16.mxu0 0
  %685 = vmatpush1.bf16.msra.mxu0 0
  %686 = vmatprep.subr.bf16.mxu0 0
  %687 = vmatpush1.bf16.msra.mxu0 0
  %688 = vmatprep.subr.bf16.mxu0 0
  %689 = vmatpush1.bf16.msra.mxu0 0
  %690 = vmatprep.subr.bf16.mxu0 0
  %691 = vmatpush1.bf16.msra.mxu0 0
  %692 = vmatprep.mubr.bf16.mxu0 0
  %693 = vmatmul.mubr.bf16.gmra.mrb[0].mxu0 %v637
  %v694 = vpop.f32.mrb[0].mxu0
  %v695 = vadd.f32 %v628, %v694
  %v696 = vpop.f32.mrb[0].mxu0
  %v697 = vpop.f32.mrb[0].mxu0
  %v698 = vadd.f32 %v628, %v697
  %v699 = vpop.f32.mrb[0].mxu0
  %700 = vmatprep.mubr.bf16.mxu0 0
  %701 = vmatmul.mubr.bf16.gmra.mrb[0].mxu0 %v640
  %v702 = vpop.f32.mrb[0].mxu0
  %v703 = vadd.f32 %v628, %v702
  %v704 = vpop.f32.mrb[0].mxu0
  %v705 = vpop.f32.mrb[0].mxu0
  %v706 = vadd.f32 %v628, %v705
  %v707 = vpop.f32.mrb[0].mxu0
  %708 = vmatprep.mubr.bf16.mxu0 0
  %709 = vmatmul.mubr.bf16.gmra.mrb[0].mxu0 %v643
  %v710 = vpop.f32.mrb[0].mxu0
  %v711 = vadd.f32 %v628, %v710
  %v712 = vpop.f32.mrb[0].mxu0
  %v713 = vpop.f32.mrb[0].mxu0
  %v714 = vadd.f32 %v628, %v713
  %v715 = vpop.f32.mrb[0].mxu0
  %716 = vmatprep.mubr.bf16.mxu0 0
  %717 = vmatmul.mubr.bf16.gmra.mrb[0].mxu0 %v646
  %v718 = vpop.f32.mrb[0].mxu0
  %v719 = vadd.f32 %v628, %v718
  %v720 = vpop.f32.mrb[0].mxu0
  %v721 = vpop.f32.mrb[0].mxu0
  %v722 = vadd.f32 %v628, %v721
  %v723 = vpop.f32.mrb[0].mxu0
  %724 = vmatprep.mubr.bf16.mxu0 0
  %725 = vmatmul.mubr.bf16.gmra.mrb[0].mxu0 %v649
  %v726 = vpop.f32.mrb[0].mxu0
  %v727 = vadd.f32 %v628, %v726
  %v728 = vpop.f32.mrb[0].mxu0
  %v729 = vpop.f32.mrb[0].mxu0
  %v730 = vadd.f32 %v628, %v729
  %v731 = vpop.f32.mrb[0].mxu0
  %732 = vmatprep.mubr.bf16.mxu0 0
  %733 = vmatmul.mubr.bf16.gmra.mrb[0].mxu0 %v652
  %v734 = vpop.f32.mrb[0].mxu0
  %v735 = vadd.f32 %v628, %v734
  %v736 = vpop.f32.mrb[0].mxu0
  %v737 = vpop.f32.mrb[0].mxu0
  %v738 = vadd.f32 %v628, %v737
  %v739 = vpop.f32.mrb[0].mxu0
  %740 = vmatprep.mubr.bf16.mxu0 0
  %741 = vmatmul.mubr.bf16.gmra.mrb[0].mxu0 %v655
  %v742 = vpop.f32.mrb[0].mxu0
  %v743 = vadd.f32 %v628, %v742
  %v744 = vpop.f32.mrb[0].mxu0
  %v745 = vpop.f32.mrb[0].mxu0
  %v746 = vadd.f32 %v628, %v745
  %v747 = vpop.f32.mrb[0].mxu0
  %748 = vmatprep.mubr.bf16.mxu0 0
  %749 = vmatmul.mubr.bf16.gmra.mrb[0].mxu0 %v658
  %v750 = vpop.f32.mrb[0].mxu0
  %v751 = vadd.f32 %v628, %v750
  %v752 = vpop.f32.mrb[0].mxu0
  %v753 = vpop.f32.mrb[0].mxu0
  %v754 = vadd.f32 %v628, %v753
  %v755 = vpop.f32.mrb[0].mxu0
  %756 = vdwg.mxu0
  %v757 = vmax.f32 %v695, 0.0
  %v758 = vmax.f32 %v698, 0.0
  %v759 = vmax.f32 %v703, 0.0
  %v760 = vmax.f32 %v706, 0.0
  %v761 = vmax.f32 %v711, 0.0
  %v762 = vmax.f32 %v714, 0.0
  %v763 = vmax.f32 %v719, 0.0
  %v764 = vmax.f32 %v722, 0.0
  %v765 = vmax.f32 %v727, 0.0
  %v766 = vmax.f32 %v730, 0.0
  %v767 = vmax.f32 %v735, 0.0
  %v768 = vmax.f32 %v738, 0.0
  %v769 = vmax.f32 %v743, 0.0
  %v770 = vmax.f32 %v746, 0.0
  %v771 = vmax.f32 %v751, 0.0
  %v772 = vmax.f32 %v754, 0.0
  %v773 = vpack.c.bf16 %v758, %v757
  %v774 = vpack.c.bf16 %v760, %v759
  %v775 = vpack.c.bf16 %v762, %v761
  %v776 = vpack.c.bf16 %v764, %v763
  %v777 = vpack.c.bf16 %v766, %v765
  %v778 = vpack.c.bf16 %v768, %v767
  %v779 = vpack.c.bf16 %v770, %v769
  %v780 = vpack.c.bf16 %v772, %v771
  %v781 = vld [vmem:[%s7] sm:$0xf]
  %v782 = vld [vmem:[%s7 + $0x4] sm:$0xf]
  %v783 = vld [vmem:[%s7 + $0x8] sm:$0xf]
  %v784 = vld [vmem:[%s7 + $0xc] sm:$0xf]
  %v785 = vld [vmem:[%s7 + $0x10] sm:$0xf]
  %v786 = vld [vmem:[%s7 + $0x14] sm:$0xf]
  %v787 = vld [vmem:[%s7 + $0x18] sm:$0xf]
  %v788 = vld [vmem:[%s7 + $0x1c] sm:$0xf]
  %v789 = vld [vmem:[%s7 + $0x20] sm:$0xf]
  %v790 = vld [vmem:[%s7 + $0x24] sm:$0xf]
  %v791 = vld [vmem:[%s7 + $0x28] sm:$0xf]
  %v792 = vld [vmem:[%s7 + $0x2c] sm:$0xf]
  %v793 = vld [vmem:[%s7 + $0x30] sm:$0xf]
  %v794 = vld [vmem:[%s7 + $0x34] sm:$0xf]
  %v795 = vld [vmem:[%s7 + $0x38] sm:$0xf]
  %v796 = vld [vmem:[%s7 + $0x3c] sm:$0xf]
  %v797 = vld [vmem:[%s8] sm:$0x1]
  %v799 = vlaneseq
  %v800 = vshrl.u32 %v799, 7
  %v801 = vsub.s32 0, %v800
  %v802 = vrot.slane %v797, %v801
  %v820 = vunpack.c.l.b16 %v781
  %v821 = vunpack.c.l.b16 %v782
  %v822 = vunpack.c.l.b16 %v783
  %v823 = vunpack.c.l.b16 %v784
  %v824 = vunpack.c.l.b16 %v785
  %v825 = vunpack.c.l.b16 %v786
  %v826 = vunpack.c.l.b16 %v787
  %v827 = vunpack.c.l.b16 %v788
  %v828 = vunpack.c.l.b16 %v789
  %v829 = vunpack.c.l.b16 %v790
  %v830 = vunpack.c.l.b16 %v791
  %v831 = vunpack.c.l.b16 %v792
  %v832 = vunpack.c.l.b16 %v793
  %v833 = vunpack.c.l.b16 %v794
  %v834 = vunpack.c.l.b16 %v795
  %v835 = vunpack.c.l.b16 %v796
  %v836 = vpack.c.b16 %v821, %v820
  %v837 = vpack.c.b16 %v823, %v822
  %v838 = vpack.c.b16 %v825, %v824
  %v839 = vpack.c.b16 %v827, %v826
  %v840 = vpack.c.b16 %v829, %v828
  %v841 = vpack.c.b16 %v831, %v830
  %v842 = vpack.c.b16 %v833, %v832
  %v843 = vpack.c.b16 %v835, %v834
  %852 = vmatprep.subr.bf16.mxu0 0
  %853 = vmatpush1.bf16.msra.mxu0 %v836
  %854 = vmatprep.subr.bf16.mxu0 0
  %855 = vmatpush1.bf16.msra.mxu0 %v837
  %856 = vmatprep.subr.bf16.mxu0 0
  %857 = vmatpush1.bf16.msra.mxu0 %v838
  %858 = vmatprep.subr.bf16.mxu0 0
  %859 = vmatpush1.bf16.msra.mxu0 %v839
  %860 = vmatprep.subr.bf16.mxu0 0
  %861 = vmatpush1.bf16.msra.mxu0 %v840
  %862 = vmatprep.subr.bf16.mxu0 0
  %863 = vmatpush1.bf16.msra.mxu0 %v841
  %864 = vmatprep.subr.bf16.mxu0 0
  %865 = vmatpush1.bf16.msra.mxu0 %v842
  %866 = vmatprep.subr.bf16.mxu0 0
  %867 = vmatpush1.bf16.msra.mxu0 %v843
  %868 = vmatprep.subr.bf16.mxu0 0
  %869 = vmatpush1.bf16.msra.mxu0 0
  %870 = vmatprep.subr.bf16.mxu0 0
  %871 = vmatpush1.bf16.msra.mxu0 0
  %872 = vmatprep.subr.bf16.mxu0 0
  %873 = vmatpush1.bf16.msra.mxu0 0
  %874 = vmatprep.subr.bf16.mxu0 0
  %875 = vmatpush1.bf16.msra.mxu0 0
  %876 = vmatprep.subr.bf16.mxu0 0
  %877 = vmatpush1.bf16.msra.mxu0 0
  %878 = vmatprep.subr.bf16.mxu0 0
  %879 = vmatpush1.bf16.msra.mxu0 0
  %880 = vmatprep.subr.bf16.mxu0 0
  %881 = vmatpush1.bf16.msra.mxu0 0
  %882 = vmatprep.subr.bf16.mxu0 0
  %883 = vmatpush1.bf16.msra.mxu0 0
  %884 = vmatprep.mubr.bf16.mxu0 0
  %885 = vmatmul.mubr.bf16.gmra.mrb[0].mxu0 %v773
  %v886 = vpop.f32.mrb[0].mxu0
  %v887 = vadd.f32 %v802, %v886
  %v888 = vpop.f32.mrb[0].mxu0
  %v889 = vpop.f32.mrb[0].mxu0
  %v890 = vadd.f32 %v802, %v889
  %v891 = vpop.f32.mrb[0].mxu0
  %892 = vmatprep.mubr.bf16.mxu0 0
  %893 = vmatmul.mubr.bf16.gmra.mrb[0].mxu0 %v774
  %v894 = vpop.f32.mrb[0].mxu0
  %v895 = vadd.f32 %v802, %v894
  %v896 = vpop.f32.mrb[0].mxu0
  %v897 = vpop.f32.mrb[0].mxu0
  %v898 = vadd.f32 %v802, %v897
  %v899 = vpop.f32.mrb[0].mxu0
  %900 = vmatprep.mubr.bf16.mxu0 0
  %901 = vmatmul.mubr.bf16.gmra.mrb[0].mxu0 %v775
  %v902 = vpop.f32.mrb[0].mxu0
  %v903 = vadd.f32 %v802, %v902
  %v904 = vpop.f32.mrb[0].mxu0
  %v905 = vpop.f32.mrb[0].mxu0
  %v906 = vadd.f32 %v802, %v905
  %v907 = vpop.f32.mrb[0].mxu0
  %908 = vmatprep.mubr.bf16.mxu0 0
  %909 = vmatmul.mubr.bf16.gmra.mrb[0].mxu0 %v776
  %v910 = vpop.f32.mrb[0].mxu0
  %v911 = vadd.f32 %v802, %v910
  %v912 = vpop.f32.mrb[0].mxu0
  %v913 = vpop.f32.mrb[0].mxu0
  %v914 = vadd.f32 %v802, %v913
  %v915 = vpop.f32.mrb[0].mxu0
  %916 = vmatprep.mubr.bf16.mxu0 0
  %917 = vmatmul.mubr.bf16.gmra.mrb[0].mxu0 %v777
  %v918 = vpop.f32.mrb[0].mxu0
  %v919 = vadd.f32 %v802, %v918
  %v920 = vpop.f32.mrb[0].mxu0
  %v921 = vpop.f32.mrb[0].mxu0
  %v922 = vadd.f32 %v802, %v921
  %v923 = vpop.f32.mrb[0].mxu0
  %924 = vmatprep.mubr.bf16.mxu0 0
  %925 = vmatmul.mubr.bf16.gmra.mrb[0].mxu0 %v778
  %v926 = vpop.f32.mrb[0].mxu0
  %v927 = vadd.f32 %v802, %v926
  %v928 = vpop.f32.mrb[0].mxu0
  %v929 = vpop.f32.mrb[0].mxu0
  %v930 = vadd.f32 %v802, %v929
  %v931 = vpop.f32.mrb[0].mxu0
  %932 = vmatprep.mubr.bf16.mxu0 0
  %933 = vmatmul.mubr.bf16.gmra.mrb[0].mxu0 %v779
  %v934 = vpop.f32.mrb[0].mxu0
  %v935 = vadd.f32 %v802, %v934
  %v936 = vpop.f32.mrb[0].mxu0
  %v937 = vpop.f32.mrb[0].mxu0
  %v938 = vadd.f32 %v802, %v937
  %v939 = vpop.f32.mrb[0].mxu0
  %940 = vmatprep.mubr.bf16.mxu0 0
  %941 = vmatmul.mubr.bf16.gmra.mrb[0].mxu0 %v780
  %v942 = vpop.f32.mrb[0].mxu0
  %v943 = vadd.f32 %v802, %v942
  %v944 = vpop.f32.mrb[0].mxu0
  %v945 = vpop.f32.mrb[0].mxu0
  %v946 = vadd.f32 %v802, %v945
  %v947 = vpop.f32.mrb[0].mxu0
  %948 = vdwg.mxu0
  %v949 = vmax.f32 %v887, 0.0
  %v950 = vmax.f32 %v890, 0.0
  %v951 = vmax.f32 %v895, 0.0
  %v952 = vmax.f32 %v898, 0.0
  %v953 = vmax.f32 %v903, 0.0
  %v954 = vmax.f32 %v906, 0.0
  %v955 = vmax.f32 %v911, 0.0
  %v956 = vmax.f32 %v914, 0.0
  %v957 = vmax.f32 %v919, 0.0
  %v958 = vmax.f32 %v922, 0.0
  %v959 = vmax.f32 %v927, 0.0
  %v960 = vmax.f32 %v930, 0.0
  %v961 = vmax.f32 %v935, 0.0
  %v962 = vmax.f32 %v938, 0.0
  %v963 = vmax.f32 %v943, 0.0
  %v964 = vmax.f32 %v946, 0.0
  %v965 = vpack.c.bf16 %v950, %v949
  %v966 = vpack.c.bf16 %v952, %v951
  %v967 = vpack.c.bf16 %v954, %v953
  %v968 = vpack.c.bf16 %v956, %v955
  %v969 = vpack.c.bf16 %v958, %v957
  %v970 = vpack.c.bf16 %v960, %v959
  %v971 = vpack.c.bf16 %v962, %v961
  %v972 = vpack.c.bf16 %v964, %v963
  %v973 = vld [vmem:[%s9] sm:$0xf]
  %v974 = vld [vmem:[%s9 + $0x4] sm:$0xf]
  %v975 = vld [vmem:[%s9 + $0x8] sm:$0xf]
  %v976 = vld [vmem:[%s9 + $0xc] sm:$0xf]
  %v977 = vld [vmem:[%s9 + $0x10] sm:$0xf]
  %v978 = vld [vmem:[%s9 + $0x14] sm:$0xf]
  %v979 = vld [vmem:[%s9 + $0x18] sm:$0xf]
  %v980 = vld [vmem:[%s9 + $0x1c] sm:$0xf]
  %v981 = vld [vmem:[%s9 + $0x20] sm:$0xf]
  %v982 = vld [vmem:[%s9 + $0x24] sm:$0xf]
  %v983 = vld [vmem:[%s9 + $0x28] sm:$0xf]
  %v984 = vld [vmem:[%s9 + $0x2c] sm:$0xf]
  %v985 = vld [vmem:[%s9 + $0x30] sm:$0xf]
  %v986 = vld [vmem:[%s9 + $0x34] sm:$0xf]
  %v987 = vld [vmem:[%s9 + $0x38] sm:$0xf]
  %v988 = vld [vmem:[%s9 + $0x3c] sm:$0xf]
  %v989 = vld [vmem:[%s10] sm:$0x1]
  %v991 = vlaneseq
  %v992 = vshrl.u32 %v991, 7
  %v993 = vsub.s32 0, %v992
  %v994 = vrot.slane %v989, %v993
  %v1012 = vunpack.c.l.b16 %v973
  %v1013 = vunpack.c.l.b16 %v974
  %v1014 = vunpack.c.l.b16 %v975
  %v1015 = vunpack.c.l.b16 %v976
  %v1016 = vunpack.c.l.b16 %v977
  %v1017 = vunpack.c.l.b16 %v978
  %v1018 = vunpack.c.l.b16 %v979
  %v1019 = vunpack.c.l.b16 %v980
  %v1020 = vunpack.c.l.b16 %v981
  %v1021 = vunpack.c.l.b16 %v982
  %v1022 = vunpack.c.l.b16 %v983
  %v1023 = vunpack.c.l.b16 %v984
  %v1024 = vunpack.c.l.b16 %v985
  %v1025 = vunpack.c.l.b16 %v986
  %v1026 = vunpack.c.l.b16 %v987
  %v1027 = vunpack.c.l.b16 %v988
  %v1028 = vpack.c.b16 %v1013, %v1012
  %v1029 = vpack.c.b16 %v1015, %v1014
  %v1030 = vpack.c.b16 %v1017, %v1016
  %v1031 = vpack.c.b16 %v1019, %v1018
  %v1032 = vpack.c.b16 %v1021, %v1020
  %v1033 = vpack.c.b16 %v1023, %v1022
  %v1034 = vpack.c.b16 %v1025, %v1024
  %v1035 = vpack.c.b16 %v1027, %v1026
  %1044 = vmatprep.subr.bf16.mxu0 0
  %1045 = vmatpush1.bf16.msra.mxu0 %v1028
  %1046 = vmatprep.subr.bf16.mxu0 0
  %1047 = vmatpush1.bf16.msra.mxu0 %v1029
  %1048 = vmatprep.subr.bf16.mxu0 0
  %1049 = vmatpush1.bf16.msra.mxu0 %v1030
  %1050 = vmatprep.subr.bf16.mxu0 0
  %1051 = vmatpush1.bf16.msra.mxu0 %v1031
  %1052 = vmatprep.subr.bf16.mxu0 0
  %1053 = vmatpush1.bf16.msra.mxu0 %v1032
  %1054 = vmatprep.subr.bf16.mxu0 0
  %1055 = vmatpush1.bf16.msra.mxu0 %v1033
  %1056 = vmatprep.subr.bf16.mxu0 0
  %1057 = vmatpush1.bf16.msra.mxu0 %v1034
  %1058 = vmatprep.subr.bf16.mxu0 0
  %1059 = vmatpush1.bf16.msra.mxu0 %v1035
  %1060 = vmatprep.subr.bf16.mxu0 0
  %1061 = vmatpush1.bf16.msra.mxu0 0
  %1062 = vmatprep.subr.bf16.mxu0 0
  %1063 = vmatpush1.bf16.msra.mxu0 0
  %1064 = vmatprep.subr.bf16.mxu0 0
  %1065 = vmatpush1.bf16.msra.mxu0 0
  %1066 = vmatprep.subr.bf16.mxu0 0
  %1067 = vmatpush1.bf16.msra.mxu0 0
  %1068 = vmatprep.subr.bf16.mxu0 0
  %1069 = vmatpush1.bf16.msra.mxu0 0
  %1070 = vmatprep.subr.bf16.mxu0 0
  %1071 = vmatpush1.bf16.msra.mxu0 0
  %1072 = vmatprep.subr.bf16.mxu0 0
  %1073 = vmatpush1.bf16.msra.mxu0 0
  %1074 = vmatprep.subr.bf16.mxu0 0
  %1075 = vmatpush1.bf16.msra.mxu0 0
  %1076 = vmatprep.mubr.bf16.mxu0 0
  %1077 = vmatmul.mubr.bf16.gmra.mrb[0].mxu0 %v965
  %v1078 = vpop.f32.mrb[0].mxu0
  %v1079 = vadd.f32 %v994, %v1078
  %v1080 = vpop.f32.mrb[0].mxu0
  %v1081 = vpop.f32.mrb[0].mxu0
  %v1082 = vadd.f32 %v994, %v1081
  %v1083 = vpop.f32.mrb[0].mxu0
  %1084 = vmatprep.mubr.bf16.mxu0 0
  %1085 = vmatmul.mubr.bf16.gmra.mrb[0].mxu0 %v966
  %v1086 = vpop.f32.mrb[0].mxu0
  %v1087 = vadd.f32 %v994, %v1086
  %v1088 = vpop.f32.mrb[0].mxu0
  %v1089 = vpop.f32.mrb[0].mxu0
  %v1090 = vadd.f32 %v994, %v1089
  %v1091 = vpop.f32.mrb[0].mxu0
  %1092 = vmatprep.mubr.bf16.mxu0 0
  %1093 = vmatmul.mubr.bf16.gmra.mrb[0].mxu0 %v967
  %v1094 = vpop.f32.mrb[0].mxu0
  %v1095 = vadd.f32 %v994, %v1094
  %v1096 = vpop.f32.mrb[0].mxu0
  %v1097 = vpop.f32.mrb[0].mxu0
  %v1098 = vadd.f32 %v994, %v1097
  %v1099 = vpop.f32.mrb[0].mxu0
  %1100 = vmatprep.mubr.bf16.mxu0 0
  %1101 = vmatmul.mubr.bf16.gmra.mrb[0].mxu0 %v968
  %v1102 = vpop.f32.mrb[0].mxu0
  %v1103 = vadd.f32 %v994, %v1102
  %v1104 = vpop.f32.mrb[0].mxu0
  %v1105 = vpop.f32.mrb[0].mxu0
  %v1106 = vadd.f32 %v994, %v1105
  %v1107 = vpop.f32.mrb[0].mxu0
  %1108 = vmatprep.mubr.bf16.mxu0 0
  %1109 = vmatmul.mubr.bf16.gmra.mrb[0].mxu0 %v969
  %v1110 = vpop.f32.mrb[0].mxu0
  %v1111 = vadd.f32 %v994, %v1110
  %v1112 = vpop.f32.mrb[0].mxu0
  %v1113 = vpop.f32.mrb[0].mxu0
  %v1114 = vadd.f32 %v994, %v1113
  %v1115 = vpop.f32.mrb[0].mxu0
  %1116 = vmatprep.mubr.bf16.mxu0 0
  %1117 = vmatmul.mubr.bf16.gmra.mrb[0].mxu0 %v970
  %v1118 = vpop.f32.mrb[0].mxu0
  %v1119 = vadd.f32 %v994, %v1118
  %v1120 = vpop.f32.mrb[0].mxu0
  %v1121 = vpop.f32.mrb[0].mxu0
  %v1122 = vadd.f32 %v994, %v1121
  %v1123 = vpop.f32.mrb[0].mxu0
  %1124 = vmatprep.mubr.bf16.mxu0 0
  %1125 = vmatmul.mubr.bf16.gmra.mrb[0].mxu0 %v971
  %v1126 = vpop.f32.mrb[0].mxu0
  %v1127 = vadd.f32 %v994, %v1126
  %v1128 = vpop.f32.mrb[0].mxu0
  %v1129 = vpop.f32.mrb[0].mxu0
  %v1130 = vadd.f32 %v994, %v1129
  %v1131 = vpop.f32.mrb[0].mxu0
  %1132 = vmatprep.mubr.bf16.mxu0 0
  %1133 = vmatmul.mubr.bf16.gmra.mrb[0].mxu0 %v972
  %v1134 = vpop.f32.mrb[0].mxu0
  %v1135 = vadd.f32 %v994, %v1134
  %v1136 = vpop.f32.mrb[0].mxu0
  %v1137 = vpop.f32.mrb[0].mxu0
  %v1138 = vadd.f32 %v994, %v1137
  %v1139 = vpop.f32.mrb[0].mxu0
  %1140 = vdwg.mxu0
  %1141 = vmax.xlane.f32.xlu0 %v1079
  %v1142 = vpop.xlane.xlu0 %1141
  %1143 = vmax.xlane.f32.xlu0 %v1082
  %v1144 = vpop.xlane.xlu0 %1143
  %1145 = vmax.xlane.f32.xlu0 %v1087
  %v1146 = vpop.xlane.xlu0 %1145
  %1147 = vmax.xlane.f32.xlu0 %v1090
  %v1148 = vpop.xlane.xlu0 %1147
  %1149 = vmax.xlane.f32.xlu0 %v1095
  %v1150 = vpop.xlane.xlu0 %1149
  %1151 = vmax.xlane.f32.xlu0 %v1098
  %v1152 = vpop.xlane.xlu0 %1151
  %1153 = vmax.xlane.f32.xlu0 %v1103
  %v1154 = vpop.xlane.xlu0 %1153
  %1155 = vmax.xlane.f32.xlu0 %v1106
  %v1156 = vpop.xlane.xlu0 %1155
  %1157 = vmax.xlane.f32.xlu0 %v1111
  %v1158 = vpop.xlane.xlu0 %1157
  %1159 = vmax.xlane.f32.xlu0 %v1114
  %v1160 = vpop.xlane.xlu0 %1159
  %1161 = vmax.xlane.f32.xlu0 %v1119
  %v1162 = vpop.xlane.xlu0 %1161
  %1163 = vmax.xlane.f32.xlu0 %v1122
  %v1164 = vpop.xlane.xlu0 %1163
  %1165 = vmax.xlane.f32.xlu0 %v1127
  %v1166 = vpop.xlane.xlu0 %1165
  %1167 = vmax.xlane.f32.xlu0 %v1130
  %v1168 = vpop.xlane.xlu0 %1167
  %1169 = vmax.xlane.f32.xlu0 %v1135
  %v1170 = vpop.xlane.xlu0 %1169
  %1171 = vmax.xlane.f32.xlu0 %v1138
  %v1172 = vpop.xlane.xlu0 %1171
  %v1173 = vsub.f32 %v1079, %v1142
  %v1174 = vsub.f32 %v1082, %v1144
  %v1175 = vsub.f32 %v1087, %v1146
  %v1176 = vsub.f32 %v1090, %v1148
  %v1177 = vsub.f32 %v1095, %v1150
  %v1178 = vsub.f32 %v1098, %v1152
  %v1179 = vsub.f32 %v1103, %v1154
  %v1180 = vsub.f32 %v1106, %v1156
  %v1181 = vsub.f32 %v1111, %v1158
  %v1182 = vsub.f32 %v1114, %v1160
  %v1183 = vsub.f32 %v1119, %v1162
  %v1184 = vsub.f32 %v1122, %v1164
  %v1185 = vsub.f32 %v1127, %v1166
  %v1186 = vsub.f32 %v1130, %v1168
  %v1187 = vsub.f32 %v1135, %v1170
  %v1188 = vsub.f32 %v1138, %v1172
  %v1189 = vmul.f32 %v1173, 1.442695
  %v1190 = vpow.pop %v1189
  %v1191 = vmul.f32 %v1174, 1.442695
  %v1192 = vpow.pop %v1191
  %v1193 = vmul.f32 %v1175, 1.442695
  %v1194 = vpow.pop %v1193
  %v1195 = vmul.f32 %v1176, 1.442695
  %v1196 = vpow.pop %v1195
  %v1197 = vmul.f32 %v1177, 1.442695
  %v1198 = vpow.pop %v1197
  %v1199 = vmul.f32 %v1178, 1.442695
  %v1200 = vpow.pop %v1199
  %v1201 = vmul.f32 %v1179, 1.442695
  %v1202 = vpow.pop %v1201
  %v1203 = vmul.f32 %v1180, 1.442695
  %v1204 = vpow.pop %v1203
  %v1205 = vmul.f32 %v1181, 1.442695
  %v1206 = vpow.pop %v1205
  %v1207 = vmul.f32 %v1182, 1.442695
  %v1208 = vpow.pop %v1207
  %v1209 = vmul.f32 %v1183, 1.442695
  %v1210 = vpow.pop %v1209
  %v1211 = vmul.f32 %v1184, 1.442695
  %v1212 = vpow.pop %v1211
  %v1213 = vmul.f32 %v1185, 1.442695
  %v1214 = vpow.pop %v1213
  %v1215 = vmul.f32 %v1186, 1.442695
  %v1216 = vpow.pop %v1215
  %v1217 = vmul.f32 %v1187, 1.442695
  %v1218 = vpow.pop %v1217
  %v1219 = vmul.f32 %v1188, 1.442695
  %v1220 = vpow.pop %v1219
  %1221 = vadd.xlane.f32.xlu0 %v1190
  %v1222 = vpop.xlane.xlu0 %1221
  %1223 = vadd.xlane.f32.xlu0 %v1192
  %v1224 = vpop.xlane.xlu0 %1223
  %1225 = vadd.xlane.f32.xlu0 %v1194
  %v1226 = vpop.xlane.xlu0 %1225
  %1227 = vadd.xlane.f32.xlu0 %v1196
  %v1228 = vpop.xlane.xlu0 %1227
  %1229 = vadd.xlane.f32.xlu0 %v1198
  %v1230 = vpop.xlane.xlu0 %1229
  %1231 = vadd.xlane.f32.xlu0 %v1200
  %v1232 = vpop.xlane.xlu0 %1231
  %1233 = vadd.xlane.f32.xlu0 %v1202
  %v1234 = vpop.xlane.xlu0 %1233
  %1235 = vadd.xlane.f32.xlu0 %v1204
  %v1236 = vpop.xlane.xlu0 %1235
  %1237 = vadd.xlane.f32.xlu0 %v1206
  %v1238 = vpop.xlane.xlu0 %1237
  %1239 = vadd.xlane.f32.xlu0 %v1208
  %v1240 = vpop.xlane.xlu0 %1239
  %1241 = vadd.xlane.f32.xlu0 %v1210
  %v1242 = vpop.xlane.xlu0 %1241
  %1243 = vadd.xlane.f32.xlu0 %v1212
  %v1244 = vpop.xlane.xlu0 %1243
  %1245 = vadd.xlane.f32.xlu0 %v1214
  %v1246 = vpop.xlane.xlu0 %1245
  %1247 = vadd.xlane.f32.xlu0 %v1216
  %v1248 = vpop.xlane.xlu0 %1247
  %1249 = vadd.xlane.f32.xlu0 %v1218
  %v1250 = vpop.xlane.xlu0 %1249
  %1251 = vadd.xlane.f32.xlu0 %v1220
  %v1252 = vpop.xlane.xlu0 %1251
  %v1253 = vlog2.pop %v1222
  %v1254 = vmul.f32 %v1253, 0.6931472
  %v1255 = vlog2.pop %v1224
  %v1256 = vmul.f32 %v1255, 0.6931472
  %v1257 = vlog2.pop %v1226
  %v1258 = vmul.f32 %v1257, 0.6931472
  %v1259 = vlog2.pop %v1228
  %v1260 = vmul.f32 %v1259, 0.6931472
  %v1261 = vlog2.pop %v1230
  %v1262 = vmul.f32 %v1261, 0.6931472
  %v1263 = vlog2.pop %v1232
  %v1264 = vmul.f32 %v1263, 0.6931472
  %v1265 = vlog2.pop %v1234
  %v1266 = vmul.f32 %v1265, 0.6931472
  %v1267 = vlog2.pop %v1236
  %v1268 = vmul.f32 %v1267, 0.6931472
  %v1269 = vlog2.pop %v1238
  %v1270 = vmul.f32 %v1269, 0.6931472
  %v1271 = vlog2.pop %v1240
  %v1272 = vmul.f32 %v1271, 0.6931472
  %v1273 = vlog2.pop %v1242
  %v1274 = vmul.f32 %v1273, 0.6931472
  %v1275 = vlog2.pop %v1244
  %v1276 = vmul.f32 %v1275, 0.6931472
  %v1277 = vlog2.pop %v1246
  %v1278 = vmul.f32 %v1277, 0.6931472
  %v1279 = vlog2.pop %v1248
  %v1280 = vmul.f32 %v1279, 0.6931472
  %v1281 = vlog2.pop %v1250
  %v1282 = vmul.f32 %v1281, 0.6931472
  %v1283 = vlog2.pop %v1252
  %v1284 = vmul.f32 %v1283, 0.6931472
  %v1285 = vsub.f32 %v1173, %v1254
  %v1286 = vsub.f32 %v1174, %v1256
  %v1287 = vsub.f32 %v1175, %v1258
  %v1288 = vsub.f32 %v1176, %v1260
  %v1289 = vsub.f32 %v1177, %v1262
  %v1290 = vsub.f32 %v1178, %v1264
  %v1291 = vsub.f32 %v1179, %v1266
  %v1292 = vsub.f32 %v1180, %v1268
  %v1293 = vsub.f32 %v1181, %v1270
  %v1294 = vsub.f32 %v1182, %v1272
  %v1295 = vsub.f32 %v1183, %v1274
  %v1296 = vsub.f32 %v1184, %v1276
  %v1297 = vsub.f32 %v1185, %v1278
  %v1298 = vsub.f32 %v1186, %v1280
  %v1299 = vsub.f32 %v1187, %v1282
  %v1300 = vsub.f32 %v1188, %v1284
  %v1301 = vmul.f32 %v1285, 1.442695
  %v1302 = vpow.pop %v1301
  %v1303 = vmul.f32 %v1286, 1.442695
  %v1304 = vpow.pop %v1303
  %v1305 = vmul.f32 %v1287, 1.442695
  %v1306 = vpow.pop %v1305
  %v1307 = vmul.f32 %v1288, 1.442695
  %v1308 = vpow.pop %v1307
  %v1309 = vmul.f32 %v1289, 1.442695
  %v1310 = vpow.pop %v1309
  %v1311 = vmul.f32 %v1290, 1.442695
  %v1312 = vpow.pop %v1311
  %v1313 = vmul.f32 %v1291, 1.442695
  %v1314 = vpow.pop %v1313
  %v1315 = vmul.f32 %v1292, 1.442695
  %v1316 = vpow.pop %v1315
  %v1317 = vmul.f32 %v1293, 1.442695
  %v1318 = vpow.pop %v1317
  %v1319 = vmul.f32 %v1294, 1.442695
  %v1320 = vpow.pop %v1319
  %v1321 = vmul.f32 %v1295, 1.442695
  %v1322 = vpow.pop %v1321
  %v1323 = vmul.f32 %v1296, 1.442695
  %v1324 = vpow.pop %v1323
  %v1325 = vmul.f32 %v1297, 1.442695
  %v1326 = vpow.pop %v1325
  %v1327 = vmul.f32 %v1298, 1.442695
  %v1328 = vpow.pop %v1327
  %v1329 = vmul.f32 %v1299, 1.442695
  %v1330 = vpow.pop %v1329
  %v1331 = vmul.f32 %v1300, 1.442695
  %v1332 = vpow.pop %v1331
  %1333 = vst [vmem:[%s11] sm:$0xff] %v1302
  %1334 = vst [vmem:[%s11 + $0x8] sm:$0xff] %v1304
  %1335 = vst [vmem:[%s11 + $0x10] sm:$0xff] %v1306
  %1336 = vst [vmem:[%s11 + $0x18] sm:$0xff] %v1308
  %1337 = vst [vmem:[%s11 + $0x20] sm:$0xff] %v1310
  %1338 = vst [vmem:[%s11 + $0x28] sm:$0xff] %v1312
  %1339 = vst [vmem:[%s11 + $0x30] sm:$0xff] %v1314
  %1340 = vst [vmem:[%s11 + $0x38] sm:$0xff] %v1316
  %1341 = vst [vmem:[%s11 + $0x40] sm:$0xff] %v1318
  %1342 = vst [vmem:[%s11 + $0x48] sm:$0xff] %v1320
  %1343 = vst [vmem:[%s11 + $0x50] sm:$0xff] %v1322
  %1344 = vst [vmem:[%s11 + $0x58] sm:$0xff] %v1324
  %1345 = vst [vmem:[%s11 + $0x60] sm:$0xff] %v1326
  %1346 = vst [vmem:[%s11 + $0x68] sm:$0xff] %v1328
  %1347 = vst [vmem:[%s11 + $0x70] sm:$0xff] %v1330
  %1348 = vst [vmem:[%s11 + $0x78] sm:$0xff] %v1332
  %1349 = vst [vmem:[%s12] sm:$0xff] %v1285
  %1350 = vst [vmem:[%s12 + $0x8] sm:$0xff] %v1286
  %1351 = vst [vmem:[%s12 + $0x10] sm:$0xff] %v1287
  %1352 = vst [vmem:[%s12 + $0x18] sm:$0xff] %v1288
  %1353 = vst [vmem:[%s12 + $0x20] sm:$0xff] %v1289
  %1354 = vst [vmem:[%s12 + $0x28] sm:$0xff] %v1290
  %1355 = vst [vmem:[%s12 + $0x30] sm:$0xff] %v1291
  %1356 = vst [vmem:[%s12 + $0x38] sm:$0xff] %v1292
  %1357 = vst [vmem:[%s12 + $0x40] sm:$0xff] %v1293
  %1358 = vst [vmem:[%s12 + $0x48] sm:$0xff] %v1294
  %1359 = vst [vmem:[%s12 + $0x50] sm:$0xff] %v1295
  %1360 = vst [vmem:[%s12 + $0x58] sm:$0xff] %v1296
  %1361 = vst [vmem:[%s12 + $0x60] sm:$0xff] %v1297
  %1362 = vst [vmem:[%s12 + $0x68] sm:$0xff] %v1298
  %1363 = vst [vmem:[%s12 + $0x70] sm:$0xff] %v1299
  %1364 = vst [vmem:[%s12 + $0x78] sm:$0xff] %v1300
  // Predicated region
  $region46: #{region_detector_forward.1} parent=0 // pred_check
    _
  $region47: #{region_detector_forward.1} parent=0 // pred_check_branch
    %1366 = sbr.rel (0) target = $region49
  $region48: #{region_detector_forward.1} parent=0 // pred_region
    _
  $region49: #{region_detector_forward.1} parent=0 // pred_fallthru
    _
  // Predicated region
  $region50: #{region_detector_forward.1} parent=0 // pred_check
    _
  $region51: #{region_detector_forward.1} parent=0 // pred_check_branch
    %1368 = sbr.rel (0) target = $region53
  $region52: #{region_detector_forward.1} parent=0 // pred_region
    _
  $region53: #{region_detector_forward.1} parent=0 // pred_fallthru
    _
  // Predicated region
  $region54: #{region_detector_forward.1} parent=0 // pred_check
    _
  $region55: #{region_detector_forward.1} parent=0 // pred_check_branch
    %1370 = sbr.rel (0) target = $region57
  $region56: #{region_detector_forward.1} parent=0 // pred_region
    _
  $region57: #{region_detector_forward.1} parent=0 // pred_fallthru
    _
  // Predicated region
  $region58: #{region_detector_forward.1} parent=0 // pred_check
    _
  $region59: #{region_detector_forward.1} parent=0 // pred_check_branch
    %1372 = sbr.rel (0) target = $region61
  $region60: #{region_detector_forward.1} parent=0 // pred_region
    _
  $region61: #{region_detector_forward.1} parent=0 // pred_fallthru
    _

</llo_original>
